<compile_context>
chip_gen: v7x
topology: tpu7x:2x2x1
jax: 0.10.0
libtpu: 0.0.40
codegen_flags: <defaults>
</compile_context>

<pallas_src>
import jax
import jax.numpy as jnp
from jax.experimental import pallas as pl
from jax.experimental.pallas import tpu as pltpu

_HIGHEST = jax.lax.Precision.HIGHEST
_NT_DIMS = (((1,), (1,)), ((), ()))      # A(m,k) . B(n,k)^T -> (m,n)


def _round_up(n: int, m: int) -> int:
    return ((n + m - 1) // m) * m


def discriminator_kernel(x_ref, y_ref, w1x_ref, w1y_ref, b1_ref, w2_ref,
                         b2_ref, o_ref):
    # Layer 1 with the concat fused in: xy @ W1 == x @ W1_top + y @ W1_bot.
    h = jnp.dot(x_ref[...], w1x_ref[...],
                preferred_element_type=jnp.float32, precision=_HIGHEST)
    h = h + jnp.dot(y_ref[...], w1y_ref[...],
                    preferred_element_type=jnp.float32, precision=_HIGHEST)
    h = jnp.maximum(h + b1_ref[...], 0.0)                       # +b1, ReLU
    # TODO(synk): nn.Dropout(p=0.2) is identity in eval mode; training-mode
    # stochastic dropout (pltpu.prng_seed + prng_random_bits) not implemented.

    # Layer 2 (out_features=1), lane-dense: w2 arrives as a sublane-aligned
    # (8, S) slab with the real weights in row 0.  The NT matmul yields
    # (8, TB) with the logits in sublane 0, already laid out along lanes,
    # so the store is a full-width unmasked vst.
    logits8 = jax.lax.dot_general(w2_ref[...], h, _NT_DIMS,
                                  preferred_element_type=jnp.float32,
                                  precision=_HIGHEST)            # (8, TB)
    logit = logits8[0:1, :] + b2_ref[0]                          # (1, TB)
    prob = jax.nn.sigmoid(logit)                                 # EUP logistic
    o_ref[...] = prob.reshape(o_ref.shape).astype(o_ref.dtype)   # (1, 1, TB)


def discriminator_forward(x, y, w1, b1, w2, b2, *, block_b=1024):
    """x, y: (B, size//2) f32.  w1: (size, size), b1: (size,), w2: (size, 1),
    b2: (1,) (weights stored pre-transposed as (in, out)).  Returns (B, 1)."""
    B, F = x.shape
    S = 2 * F
    assert y.shape == (B, F)
    assert w1.shape == (S, S) and b1.shape == (S,)
    assert w2.shape == (S, 1) and b2.shape == (1,)

    # Split w1 so the concatenate never materializes in HBM.
    w1x = w1[:F, :]                               # multiplies x
    w1y = w1[F:, :]                               # multiplies y
    b1_row = b1.reshape(1, S)
    w2_rows = jnp.zeros((8, S), jnp.float32).at[0, :].set(w2[:, 0])
    b2_1d = b2.reshape(1).astype(jnp.float32)

    # Batch tile: multiple of 8 (f32 sublane); capped near B/2 so the grid has
    # >=2 "parallel" steps for v7x's two TensorCores.  No input padding: the
    # ragged last block is handled by Pallas and its rows are discarded.
    half = _round_up(max(-(-B // 2), 1), 8)
    TB = max(8, min(_round_up(block_b, 8), half))
    G = pl.cdiv(B, TB)

    # VMEM residency: x/y tiles lane-pad to 128 lanes in VMEM, i.e.
    # 2 inputs * 2 buffers * TB*128*4 B (~2 MiB at TB=1024) + resident weights.
    vmem_limit = 32 * 1024 * 1024
    w1_bytes = 4 * S * S
    weight_single_buffer = w1_bytes >= (4 << 20)      # only matters for big S
    resident_weight_bytes = w1_bytes * (1 if weight_single_buffer else 2)
    if resident_weight_bytes > 24 * 1024 * 1024:
        # TODO(synk): tile the S (reduction) axis with an f32 accumulator and
        # pl.when init/finalize once `size` outgrows v7x VMEM; not needed here.
        raise ValueError("w1 too large to keep resident in VMEM; add K-tiling")

    def const_spec(shape):
        # Constant-index operands: single-buffer once they are VMEM-relevant.
        if weight_single_buffer:
            return pl.BlockSpec(shape, lambda i: (0, 0),
                                pipeline_mode=pl.Buffered(1))
        return pl.BlockSpec(shape, lambda i: (0, 0))

    out = pl.pallas_call(
        discriminator_kernel,
        out_shape=jax.ShapeDtypeStruct((G, 1, TB), jnp.float32),
        grid_spec=pltpu.PrefetchScalarGridSpec(
            num_scalar_prefetch=0,
            grid=(G,),
            in_specs=[
                pl.BlockSpec((TB, F), lambda i: (i, 0)),            # x tile
                pl.BlockSpec((TB, F), lambda i: (i, 0)),            # y tile
                const_spec((F, S)),                                 # w1 top
                const_spec((F, S)),                                 # w1 bottom
                const_spec((1, S)),                                 # b1 row
                const_spec((8, S)),                                 # w2 slab
                pl.BlockSpec(memory_space=pltpu.MemorySpace.SMEM),  # b2 scalar
            ],
            out_specs=pl.BlockSpec((1, 1, TB), lambda i: (i, 0, 0)),
        ),
        compiler_params=pltpu.CompilerParams(
            dimension_semantics=("parallel",),   # shard batch steps across TCs
            vmem_limit_bytes=vmem_limit,
        ),
    )(x, y, w1x, w1y, b1_row, w2_rows, b2_1d)

    # (G, 1, TB) row-major == flat batch order; drop ragged tail -> (B, 1).
    return out.reshape(G * TB)[:B].reshape(B, 1)


def _reference(x, y, w1, b1, w2, b2):
    xy = jnp.concatenate((x, y), axis=-1)
    h = jnp.maximum(jnp.dot(xy, w1, precision=_HIGHEST) + b1, 0.0)
    return jax.nn.sigmoid(jnp.dot(h, w2, precision=_HIGHEST) + b2)


if __name__ == "__main__":
    length, depth = 8, 4
    size = depth * length                  # 32
    bound = 1.0 / (size ** 0.5)

    key = jax.random.PRNGKey(0)
    kw1, kb1, kw2, kb2, kd = jax.random.split(key, 5)
    # Deterministic PyTorch-style init: U(-1/sqrt(fan_in), 1/sqrt(fan_in)).
    w1 = jax.random.uniform(kw1, (size, size), jnp.float32, -bound, bound)
    b1 = jax.random.uniform(kb1, (size,), jnp.float32, -bound, bound)
    w2 = jax.random.uniform(kw2, (size, 1), jnp.float32, -bound, bound)
    b2 = jax.random.uniform(kb2, (1,), jnp.float32, -bound, bound)

    # batch=2: single (ragged) block; batch=70: two-step "parallel" grid with a
    # ragged tail — exercises the no-pad cdiv path end to end.
    for batch in (2, 70):
        kx, ky, kd = jax.random.split(kd, 3)
        x = jax.random.normal(kx, (batch, size // 2), dtype=jnp.float32)
        y = jax.random.normal(ky, (batch, size // 2), dtype=jnp.float32)

        out = discriminator_forward(x, y, w1, b1, w2, b2)
        jax.block_until_ready(out)

        ref = _reference(x, y, w1, b1, w2, b2)
        assert out.shape == (batch, 1)
        assert jnp.allclose(out, ref, atol=1e-5), f"mismatch (batch={batch})"

    print("KERNEL_OK")
</pallas_src>

<mosaic_0001>
module attributes {stable_mosaic.version = 11 : i64} {
  func.func @discriminator_kernel(%arg0: i32, %arg1: memref<8x16xf32, #tpu.memory_space<vmem>>, %arg2: memref<8x16xf32, #tpu.memory_space<vmem>>, %arg3: memref<16x32xf32, #tpu.memory_space<vmem>>, %arg4: memref<16x32xf32, #tpu.memory_space<vmem>>, %arg5: memref<1x32xf32, #tpu.memory_space<vmem>>, %arg6: memref<8x32xf32, #tpu.memory_space<vmem>>, %arg7: memref<1xf32, #tpu.memory_space<smem>>, %arg8: memref<1x1x8xf32, #tpu.memory_space<vmem>>) attributes {dimension_semantics = [#tpu.dimension_semantics<parallel>], iteration_bounds = array<i64: 1>, scalar_prefetch = 0 : i64, scratch_operands = 0 : i64, tpu.core_type = #tpu.core_type<tc>, window_params = [{transform_indices = @transform_0, window_bounds = array<i64: 8, 16>}, {transform_indices = @transform_1, window_bounds = array<i64: 8, 16>}, {pipeline_mode = #tpu.pipeline_mode<synchronous>, transform_indices = @transform_2, window_bounds = array<i64: 16, 32>}, {pipeline_mode = #tpu.pipeline_mode<synchronous>, transform_indices = @transform_3, window_bounds = array<i64: 16, 32>}, {pipeline_mode = #tpu.pipeline_mode<synchronous>, transform_indices = @transform_4, window_bounds = array<i64: 1, 32>}, {pipeline_mode = #tpu.pipeline_mode<synchronous>, transform_indices = @transform_5, window_bounds = array<i64: 8, 32>}, {transform_indices = @transform_6, window_bounds = array<i64: 1>}, {transform_indices = @transform_7, window_bounds = array<i64: 1, 1, 8>}]} {
    %c0 = arith.constant 0 : index
    %c0_0 = arith.constant 0 : index
    %0 = vector.load %arg1[%c0, %c0_0] : memref<8x16xf32, #tpu.memory_space<vmem>>, vector<8x16xf32>
    %c0_1 = arith.constant 0 : index
    %c0_2 = arith.constant 0 : index
    %1 = vector.load %arg3[%c0_1, %c0_2] : memref<16x32xf32, #tpu.memory_space<vmem>>, vector<16x32xf32>
    %cst = arith.constant dense<0.000000e+00> : vector<8x32xf32>
    %2 = tpu.matmul %0, %1, %cst {dimension_numbers = #tpu.dot_dimension_numbers<[1], [0], [0], [1], [0, 0, 1, 1], [], []>, precision = #tpu.contract_precision<fp32>} : vector<8x16xf32>, vector<16x32xf32>, vector<8x32xf32> -> vector<8x32xf32>
    %c0_3 = arith.constant 0 : index
    %c0_4 = arith.constant 0 : index
    %3 = vector.load %arg2[%c0_3, %c0_4] : memref<8x16xf32, #tpu.memory_space<vmem>>, vector<8x16xf32>
    %c0_5 = arith.constant 0 : index
    %c0_6 = arith.constant 0 : index
    %4 = vector.load %arg4[%c0_5, %c0_6] : memref<16x32xf32, #tpu.memory_space<vmem>>, vector<16x32xf32>
    %cst_7 = arith.constant dense<0.000000e+00> : vector<8x32xf32>
    %5 = tpu.matmul %3, %4, %cst_7 {dimension_numbers = #tpu.dot_dimension_numbers<[1], [0], [0], [1], [0, 0, 1, 1], [], []>, precision = #tpu.contract_precision<fp32>} : vector<8x16xf32>, vector<16x32xf32>, vector<8x32xf32> -> vector<8x32xf32>
    %6 = arith.addf %2, %5 : vector<8x32xf32>
    %c0_8 = arith.constant 0 : index
    %c0_9 = arith.constant 0 : index
    %7 = vector.load %arg5[%c0_8, %c0_9] : memref<1x32xf32, #tpu.memory_space<vmem>>, vector<1x32xf32>
    %8 = vector.broadcast %7 : vector<1x32xf32> to vector<8x32xf32>
    %9 = arith.addf %6, %8 : vector<8x32xf32>
    %cst_10 = arith.constant 0.000000e+00 : f32
    %10 = vector.broadcast %cst_10 : f32 to vector<8x32xf32>
    %11 = arith.maximumf %9, %10 : vector<8x32xf32>
    %c0_11 = arith.constant 0 : index
    %c0_12 = arith.constant 0 : index
    %12 = vector.load %arg6[%c0_11, %c0_12] : memref<8x32xf32, #tpu.memory_space<vmem>>, vector<8x32xf32>
    %cst_13 = arith.constant dense<0.000000e+00> : vector<8x8xf32>
    %13 = tpu.matmul %12, %11, %cst_13 {dimension_numbers = #tpu.dot_dimension_numbers<[1], [1], [0], [0], [0, 0, 1, 0], [], []>, precision = #tpu.contract_precision<fp32>} : vector<8x32xf32>, vector<8x32xf32>, vector<8x8xf32> -> vector<8x8xf32>
    %14 = vector.extract_strided_slice %13 {offsets = [0, 0], sizes = [1, 8], strides = [1, 1]} : vector<8x8xf32> to vector<1x8xf32>
    %c0_14 = arith.constant 0 : index
    %15 = memref.load %arg7[%c0_14] : memref<1xf32, #tpu.memory_space<smem>>
    %16 = vector.broadcast %15 : f32 to vector<1x8xf32>
    %17 = arith.addf %14, %16 : vector<1x8xf32>
    %18 = arith.negf %17 : vector<1x8xf32>
    %19 = math.exp %18 : vector<1x8xf32>
    %cst_15 = arith.constant 1.000000e+00 : f32
    %20 = vector.broadcast %cst_15 : f32 to vector<1x8xf32>
    %21 = arith.addf %20, %19 : vector<1x8xf32>
    %22 = arith.divf %20, %21 : vector<1x8xf32>
    %23 = vector.shape_cast %22 : vector<1x8xf32> to vector<1x1x8xf32>
    %c0_16 = arith.constant 0 : index
    %c0_17 = arith.constant 0 : index
    %c0_18 = arith.constant 0 : index
    %24 = vector.load %arg8[%c0_16, %c0_17, %c0_18] : memref<1x1x8xf32, #tpu.memory_space<vmem>>, vector<1x1x8xf32>
    tpu.vector_store %arg8[%c0_16, %c0_17, %c0_18], %23 {strides = array<i32>} : memref<1x1x8xf32, #tpu.memory_space<vmem>>, vector<1x1x8xf32>,
    return
  }
  func.func @transform_0(%arg0: i32) -> (i32, i32) {
    %c0_i32 = arith.constant 0 : i32
    %c0_i32_0 = arith.constant 0 : i32
    return %arg0, %c0_i32 : i32, i32
  }
  func.func @transform_1(%arg0: i32) -> (i32, i32) {
    %c0_i32 = arith.constant 0 : i32
    %c0_i32_0 = arith.constant 0 : i32
    return %arg0, %c0_i32 : i32, i32
  }
  func.func @transform_2(%arg0: i32) -> (i32, i32) {
    %c0_i32 = arith.constant 0 : i32
    %c0_i32_0 = arith.constant 0 : i32
    %c0_i32_1 = arith.constant 0 : i32
    return %c0_i32, %c0_i32_0 : i32, i32
  }
  func.func @transform_3(%arg0: i32) -> (i32, i32) {
    %c0_i32 = arith.constant 0 : i32
    %c0_i32_0 = arith.constant 0 : i32
    %c0_i32_1 = arith.constant 0 : i32
    return %c0_i32, %c0_i32_0 : i32, i32
  }
  func.func @transform_4(%arg0: i32) -> (i32, i32) {
    %c0_i32 = arith.constant 0 : i32
    %c0_i32_0 = arith.constant 0 : i32
    %c0_i32_1 = arith.constant 0 : i32
    return %c0_i32, %c0_i32_0 : i32, i32
  }
  func.func @transform_5(%arg0: i32) -> (i32, i32) {
    %c0_i32 = arith.constant 0 : i32
    %c0_i32_0 = arith.constant 0 : i32
    %c0_i32_1 = arith.constant 0 : i32
    return %c0_i32, %c0_i32_0 : i32, i32
  }
  func.func @transform_6(%arg0: i32) -> i32 {
    %c0_i32 = arith.constant 0 : i32
    %c0_i32_0 = arith.constant 0 : i32
    return %c0_i32 : i32
  }
  func.func @transform_7(%arg0: i32) -> (i32, i32, i32) {
    %c0_i32 = arith.constant 0 : i32
    %c0_i32_0 = arith.constant 0 : i32
    %c0_i32_1 = arith.constant 0 : i32
    return %arg0, %c0_i32, %c0_i32_0 : i32, i32, i32
  }
}

</mosaic_0001>

<llo_original>
// kernel: tpu_custom_call.1
$region0: #{tpu_custom_call.1}
  #allocation0 [shape = 'u32[]', space=smem, size = 0x4, offset = 0x4, fixed_abs, tag = 'smem constant byte address 0x4 - core index']
  #allocation1 [shape = 'u32[144,128]{1,0:T(1,128)}', space=vmem, size = 0x12000, scoped, tag = 'internal scratch']
  #allocation2 [shape = 'f32[1]{0:T(128)S(6)}', space=smem, size = 0x200, scoped, tag = 'scoped memory for tpu_custom_call.1']
  %s0 = inlined_call_operand.vmem [shape: f32[2,16], index: 0, kind: input, shape index: {}]
  %s1 = inlined_call_operand.vmem [shape: f32[2,16], index: 1, kind: input, shape index: {}]
  %s2 = inlined_call_operand.hbm [shape: f32[16,32], index: 2, kind: input, shape index: {}]
  %s3 = inlined_call_operand.hbm [shape: f32[16,32], index: 3, kind: input, shape index: {}]
  %s4 = inlined_call_operand.vmem [shape: f32[1,32], index: 4, kind: input, shape index: {}]
  %s5 = inlined_call_operand.vmem [shape: f32[8,32], index: 5, kind: input, shape index: {}]
  %s6 = inlined_call_operand.<no memory space> [shape: f32[1], index: 6, kind: input, shape index: {}]
  %s7 = inlined_call_operand.hbm [shape: f32[1,1,8], index: 7, kind: output, shape index: {}]
  %s8 = sld [smem:[#allocation0]]
  $region46: #{tpu_custom_call.1} parent=0
    _
  %s10 = ssub.s32 1, %s8
  %s11 = scalar_select 0, %s10, %s8
  %12 = sst [smem:[#allocation2]] %s6
  $region1: #{tpu_custom_call.1} parent=0
    #allocation3 [shape = 'u8[8192]{0}', space=vmem, size = 0x2000, scoped, tag = 'input window, operand 2, single buffered']
    #allocation4 [shape = 's32[1]{0}', space=sflag, size = 0x4, scoped, tag = 'scoped memory for tpu_custom_call.1']
    #allocation5 [shape = 's32[1]{0}', space=sflag, size = 0x4, scoped, tag = 'scoped memory for tpu_custom_call.1']
    #allocation6 [shape = 'u8[8192]{0}', space=vmem, size = 0x2000, scoped, tag = 'input window, operand 3, single buffered']
    #allocation7 [shape = 's32[1]{0}', space=sflag, size = 0x4, scoped, tag = 'scoped memory for tpu_custom_call.1']
    #allocation8 [shape = 'u8[512]{0}', space=vmem, size = 0x400, scoped, tag = 'output window, operand 0, single buffered']
    %13 = vsyncpa [#allocation4], 0
    %14 = vsyncpa [#allocation7], 0
    %15 = vsyncpa [#allocation5], 0
    // Predicated region
    $region2: #{tpu_custom_call.1} parent=1 // pred_check
      _
    $region3: #{tpu_custom_call.1} parent=1 // pred_check_branch
      %17 = sbr.rel (0) target = $region5
    $region4: #{tpu_custom_call.1} parent=1 // pred_region
      _
    $region5: #{tpu_custom_call.1} parent=1 // pred_fallthru
      _
    // Predicated region
    $region6: #{tpu_custom_call.1} parent=1 // pred_check
      _
    $region7: #{tpu_custom_call.1} parent=1 // pred_check_branch
      %19 = sbr.rel (0) target = $region9
    $region8: #{tpu_custom_call.1} parent=1 // pred_region
      _
    $region9: #{tpu_custom_call.1} parent=1 // pred_fallthru
      _
    // Predicated region
    $region10: #{tpu_custom_call.1} parent=1 // pred_check
      _
    $region11: #{tpu_custom_call.1} parent=1 // pred_check_branch
      %21 = sbr.rel (0) target = $region13
    $region12: #{tpu_custom_call.1} parent=1 // pred_region
      %s23 = ssub.s32 256, 256
      %24 = vsyncadd [#allocation4], %s23
      %s25 = sshll.u32 [#allocation3], 4
      %s26 = int_to_ptr.vmem [resolvable:$true] %s25
      %31 = dma.hbm_to_vmem [thread:$0]  %s2, 256, %s26, [#allocation4], 128, 128, 8
    $region13: #{tpu_custom_call.1} parent=1 // pred_fallthru
      _
    // Predicated region
    $region14: #{tpu_custom_call.1} parent=1 // pred_check
      _
    $region15: #{tpu_custom_call.1} parent=1 // pred_check_branch
      %33 = sbr.rel (0) target = $region17
    $region16: #{tpu_custom_call.1} parent=1 // pred_region
      %s35 = ssub.s32 256, 256
      %36 = vsyncadd [#allocation7], %s35
      %s37 = sshll.u32 [#allocation6], 4
      %s38 = int_to_ptr.vmem [resolvable:$true] %s37
      %43 = dma.hbm_to_vmem [thread:$0]  %s3, 256, %s38, [#allocation7], 128, 128, 8
    $region17: #{tpu_custom_call.1} parent=1 // pred_fallthru
      _
    // Predicated region
    $region18: #{tpu_custom_call.1} parent=1 // pred_check
      _
    $region19: #{tpu_custom_call.1} parent=1 // pred_check_branch
      %45 = sbr.rel (0) target = $region21
    $region20: #{tpu_custom_call.1} parent=1 // pred_region
      _
    $region21: #{tpu_custom_call.1} parent=1 // pred_fallthru
      _
    // Predicated region
    $region22: #{tpu_custom_call.1} parent=1 // pred_check
      _
    $region23: #{tpu_custom_call.1} parent=1 // pred_check_branch
      %47 = sbr.rel (0) target = $region25
    $region24: #{tpu_custom_call.1} parent=1 // pred_region
      _
    $region25: #{tpu_custom_call.1} parent=1 // pred_fallthru
      _
    // Predicated region
    $region26: #{tpu_custom_call.1} parent=1 // pred_check
      _
    $region27: #{tpu_custom_call.1} parent=1 // pred_check_branch
      %49 = sbr.rel (0) target = $region29
    $region28: #{tpu_custom_call.1} parent=1 // pred_region
      _
    $region29: #{tpu_custom_call.1} parent=1 // pred_fallthru
      _
    // Predicated region
    $region30: #{tpu_custom_call.1} parent=1 // pred_check
      _
    $region31: #{tpu_custom_call.1} parent=1 // pred_check_branch
      %51 = sbr.rel (0) target = $region33
    $region32: #{tpu_custom_call.1} parent=1 // pred_region
      %52 = dma.done [#allocation4], 256
    $region33: #{tpu_custom_call.1} parent=1 // pred_fallthru
      _
    // Predicated region
    $region34: #{tpu_custom_call.1} parent=1 // pred_check
      _
    $region35: #{tpu_custom_call.1} parent=1 // pred_check_branch
      %54 = sbr.rel (0) target = $region37
    $region36: #{tpu_custom_call.1} parent=1 // pred_region
      %55 = dma.done [#allocation7], 256
    $region37: #{tpu_custom_call.1} parent=1 // pred_fallthru
      _
    %v56 = vld [vmem:[%s0] sm:$0xff]
    %v57 = vld [vmem:[#allocation3] sm:$0xff]
    %v58 = vld [vmem:[#allocation3 + $0x8] sm:$0xff]
    %v59 = vld [vmem:[%s1] sm:$0xff]
    %v60 = vld [vmem:[#allocation6] sm:$0xff]
    %v61 = vld [vmem:[#allocation6 + $0x8] sm:$0xff]
    %vm62 = vcmask 130048
    %v64 = vsel %vm62, %v59, 0
    %66 = vmatprep.subr.mxu0 0.0
    %v67 = vand.u32 %v60, 4294901760
    %68 = vmatpush1.msra.mxu0 %v67
    %69 = vmatprep.subr.mxu0 0.0
    %v70 = vand.u32 %v61, 4294901760
    %71 = vmatpush1.msra.mxu0 %v70
    %72 = vmatprep.subr.mxu0 0.0
    %73 = vmatpush1.msra.mxu0 0.0
    %74 = vmatprep.subr.mxu0 0.0
    %75 = vmatpush1.msra.mxu0 0.0
    %76 = vmatprep.subr.mxu0 0.0
    %77 = vmatpush1.msra.mxu0 0.0
    %78 = vmatprep.subr.mxu0 0.0
    %79 = vmatpush1.msra.mxu0 0.0
    %80 = vmatprep.subr.mxu0 0.0
    %81 = vmatpush1.msra.mxu0 0.0
    %82 = vmatprep.subr.mxu0 0.0
    %83 = vmatpush1.msra.mxu0 0.0
    %84 = vmatprep.subr.mxu0 0.0
    %85 = vmatpush1.msra.mxu0 0.0
    %86 = vmatprep.subr.mxu0 0.0
    %87 = vmatpush1.msra.mxu0 0.0
    %88 = vmatprep.subr.mxu0 0.0
    %89 = vmatpush1.msra.mxu0 0.0
    %90 = vmatprep.subr.mxu0 0.0
    %91 = vmatpush1.msra.mxu0 0.0
    %92 = vmatprep.subr.mxu0 0.0
    %93 = vmatpush1.msra.mxu0 0.0
    %94 = vmatprep.subr.mxu0 0.0
    %95 = vmatpush1.msra.mxu0 0.0
    %96 = vmatprep.subr.mxu0 0.0
    %97 = vmatpush1.msra.mxu0 0.0
    %98 = vmatprep.subr.mxu0 0.0
    %99 = vmatpush1.msra.mxu0 0.0
    %100 = vmatprep.subr.mxu0 0.0
    %101 = vmatpush1.msra.mxu0 0.0
    %102 = vmatprep.subr.mxu0 0.0
    %103 = vmatpush1.msra.mxu0 0.0
    %104 = vmatprep.subr.mxu0 0.0
    %105 = vmatpush1.msra.mxu0 0.0
    %106 = vmatprep.subr.mxu0 0.0
    %107 = vmatpush1.msra.mxu0 0.0
    %108 = vmatprep.subr.mxu0 0.0
    %109 = vmatpush1.msra.mxu0 0.0
    %110 = vmatprep.subr.mxu0 0.0
    %111 = vmatpush1.msra.mxu0 0.0
    %112 = vmatprep.subr.mxu0 0.0
    %113 = vmatpush1.msra.mxu0 0.0
    %114 = vmatprep.subr.mxu0 0.0
    %115 = vmatpush1.msra.mxu0 0.0
    %116 = vmatprep.subr.mxu0 0.0
    %117 = vmatpush1.msra.mxu0 0.0
    %118 = vmatprep.subr.mxu0 0.0
    %119 = vmatpush1.msra.mxu0 0.0
    %120 = vmatprep.subr.mxu0 0.0
    %121 = vmatpush1.msra.mxu0 0.0
    %122 = vmatprep.subr.mxu0 0.0
    %123 = vmatpush1.msra.mxu0 0.0
    %124 = vmatprep.subr.mxu0 0.0
    %125 = vmatpush1.msra.mxu0 0.0
    %126 = vmatprep.subr.mxu0 0.0
    %127 = vmatpush1.msra.mxu0 0.0
    %128 = vmatprep.subr.mxu0 0.0
    %129 = vmatpush1.msra.mxu0 0.0
    %130 = vmatprep.subr.mxu0 0.0
    %131 = vmatpush1.msra.mxu0 0.0
    %132 = vmatprep.mubr.f32.mxu0 0.0
    %v133 = vand.u32 %v64, 4294901760
    %v134 = vsub.f32 %v64, %v133
    %v135 = vand.u32 %v134, 4294901760
    %v136 = vsub.f32 %v134, %v135
    %v137 = vand.u32 %v136, 4294901760
    %138 = vmatmul.mubr.f32.gmra.mrb[0].mxu0 %v137
    %v139 = vpop.f32.mrb[0].mxu0
    %v140 = vadd.f32 0.0, %v139
    %v141 = vpop.f32.mrb[0].mxu0
    %142 = vdwg.mxu0
    %143 = vmatprep.subr.mxu0 0.0
    %v144 = vand.u32 %v60, 4294901760
    %v145 = vsub.f32 %v60, %v144
    %v146 = vand.u32 %v145, 4294901760
    %v147 = vsub.f32 %v145, %v146
    %v148 = vand.u32 %v147, 4294901760
    %149 = vmatpush1.msra.mxu0 %v148
    %150 = vmatprep.subr.mxu0 0.0
    %v151 = vand.u32 %v61, 4294901760
    %v152 = vsub.f32 %v61, %v151
    %v153 = vand.u32 %v152, 4294901760
    %v154 = vsub.f32 %v152, %v153
    %v155 = vand.u32 %v154, 4294901760
    %156 = vmatpush1.msra.mxu0 %v155
    %157 = vmatprep.subr.mxu0 0.0
    %158 = vmatpush1.msra.mxu0 0.0
    %159 = vmatprep.subr.mxu0 0.0
    %160 = vmatpush1.msra.mxu0 0.0
    %161 = vmatprep.subr.mxu0 0.0
    %162 = vmatpush1.msra.mxu0 0.0
    %163 = vmatprep.subr.mxu0 0.0
    %164 = vmatpush1.msra.mxu0 0.0
    %165 = vmatprep.subr.mxu0 0.0
    %166 = vmatpush1.msra.mxu0 0.0
    %167 = vmatprep.subr.mxu0 0.0
    %168 = vmatpush1.msra.mxu0 0.0
    %169 = vmatprep.subr.mxu0 0.0
    %170 = vmatpush1.msra.mxu0 0.0
    %171 = vmatprep.subr.mxu0 0.0
    %172 = vmatpush1.msra.mxu0 0.0
    %173 = vmatprep.subr.mxu0 0.0
    %174 = vmatpush1.msra.mxu0 0.0
    %175 = vmatprep.subr.mxu0 0.0
    %176 = vmatpush1.msra.mxu0 0.0
    %177 = vmatprep.subr.mxu0 0.0
    %178 = vmatpush1.msra.mxu0 0.0
    %179 = vmatprep.subr.mxu0 0.0
    %180 = vmatpush1.msra.mxu0 0.0
    %181 = vmatprep.subr.mxu0 0.0
    %182 = vmatpush1.msra.mxu0 0.0
    %183 = vmatprep.subr.mxu0 0.0
    %184 = vmatpush1.msra.mxu0 0.0
    %185 = vmatprep.subr.mxu0 0.0
    %186 = vmatpush1.msra.mxu0 0.0
    %187 = vmatprep.subr.mxu0 0.0
    %188 = vmatpush1.msra.mxu0 0.0
    %189 = vmatprep.subr.mxu0 0.0
    %190 = vmatpush1.msra.mxu0 0.0
    %191 = vmatprep.subr.mxu0 0.0
    %192 = vmatpush1.msra.mxu0 0.0
    %193 = vmatprep.subr.mxu0 0.0
    %194 = vmatpush1.msra.mxu0 0.0
    %195 = vmatprep.subr.mxu0 0.0
    %196 = vmatpush1.msra.mxu0 0.0
    %197 = vmatprep.subr.mxu0 0.0
    %198 = vmatpush1.msra.mxu0 0.0
    %199 = vmatprep.subr.mxu0 0.0
    %200 = vmatpush1.msra.mxu0 0.0
    %201 = vmatprep.subr.mxu0 0.0
    %202 = vmatpush1.msra.mxu0 0.0
    %203 = vmatprep.subr.mxu0 0.0
    %204 = vmatpush1.msra.mxu0 0.0
    %205 = vmatprep.subr.mxu0 0.0
    %206 = vmatpush1.msra.mxu0 0.0
    %207 = vmatprep.subr.mxu0 0.0
    %208 = vmatpush1.msra.mxu0 0.0
    %209 = vmatprep.subr.mxu0 0.0
    %210 = vmatpush1.msra.mxu0 0.0
    %211 = vmatprep.subr.mxu0 0.0
    %212 = vmatpush1.msra.mxu0 0.0
    %213 = vmatprep.subr.mxu0 0.0
    %214 = vmatpush1.msra.mxu0 0.0
    %215 = vmatprep.subr.mxu0 0.0
    %216 = vmatpush1.msra.mxu0 0.0
    %217 = vmatprep.mubr.f32.mxu0 0.0
    %v218 = vand.u32 %v64, 4294901760
    %219 = vmatmul.mubr.f32.gmra.mrb[0].mxu0 %v218
    %v220 = vpop.f32.mrb[0].mxu0
    %v221 = vadd.f32 %v140, %v220
    %v222 = vpop.f32.mrb[0].mxu0
    %223 = vdwg.mxu0
    %224 = vmatprep.subr.mxu0 0.0
    %v225 = vand.u32 %v60, 4294901760
    %v226 = vsub.f32 %v60, %v225
    %227 = vmatpush1.msra.mxu0 %v226
    %228 = vmatprep.subr.mxu0 0.0
    %v229 = vand.u32 %v61, 4294901760
    %v230 = vsub.f32 %v61, %v229
    %231 = vmatpush1.msra.mxu0 %v230
    %232 = vmatprep.subr.mxu0 0.0
    %233 = vmatpush1.msra.mxu0 0.0
    %234 = vmatprep.subr.mxu0 0.0
    %235 = vmatpush1.msra.mxu0 0.0
    %236 = vmatprep.subr.mxu0 0.0
    %237 = vmatpush1.msra.mxu0 0.0
    %238 = vmatprep.subr.mxu0 0.0
    %239 = vmatpush1.msra.mxu0 0.0
    %240 = vmatprep.subr.mxu0 0.0
    %241 = vmatpush1.msra.mxu0 0.0
    %242 = vmatprep.subr.mxu0 0.0
    %243 = vmatpush1.msra.mxu0 0.0
    %244 = vmatprep.subr.mxu0 0.0
    %245 = vmatpush1.msra.mxu0 0.0
    %246 = vmatprep.subr.mxu0 0.0
    %247 = vmatpush1.msra.mxu0 0.0
    %248 = vmatprep.subr.mxu0 0.0
    %249 = vmatpush1.msra.mxu0 0.0
    %250 = vmatprep.subr.mxu0 0.0
    %251 = vmatpush1.msra.mxu0 0.0
    %252 = vmatprep.subr.mxu0 0.0
    %253 = vmatpush1.msra.mxu0 0.0
    %254 = vmatprep.subr.mxu0 0.0
    %255 = vmatpush1.msra.mxu0 0.0
    %256 = vmatprep.subr.mxu0 0.0
    %257 = vmatpush1.msra.mxu0 0.0
    %258 = vmatprep.subr.mxu0 0.0
    %259 = vmatpush1.msra.mxu0 0.0
    %260 = vmatprep.subr.mxu0 0.0
    %261 = vmatpush1.msra.mxu0 0.0
    %262 = vmatprep.subr.mxu0 0.0
    %263 = vmatpush1.msra.mxu0 0.0
    %264 = vmatprep.subr.mxu0 0.0
    %265 = vmatpush1.msra.mxu0 0.0
    %266 = vmatprep.subr.mxu0 0.0
    %267 = vmatpush1.msra.mxu0 0.0
    %268 = vmatprep.subr.mxu0 0.0
    %269 = vmatpush1.msra.mxu0 0.0
    %270 = vmatprep.subr.mxu0 0.0
    %271 = vmatpush1.msra.mxu0 0.0
    %272 = vmatprep.subr.mxu0 0.0
    %273 = vmatpush1.msra.mxu0 0.0
    %274 = vmatprep.subr.mxu0 0.0
    %275 = vmatpush1.msra.mxu0 0.0
    %276 = vmatprep.subr.mxu0 0.0
    %277 = vmatpush1.msra.mxu0 0.0
    %278 = vmatprep.subr.mxu0 0.0
    %279 = vmatpush1.msra.mxu0 0.0
    %280 = vmatprep.subr.mxu0 0.0
    %281 = vmatpush1.msra.mxu0 0.0
    %282 = vmatprep.subr.mxu0 0.0
    %283 = vmatpush1.msra.mxu0 0.0
    %284 = vmatprep.subr.mxu0 0.0
    %285 = vmatpush1.msra.mxu0 0.0
    %286 = vmatprep.subr.mxu0 0.0
    %287 = vmatpush1.msra.mxu0 0.0
    %288 = vmatprep.subr.mxu0 0.0
    %289 = vmatpush1.msra.mxu0 0.0
    %290 = vmatprep.subr.mxu0 0.0
    %291 = vmatpush1.msra.mxu0 0.0
    %292 = vmatprep.mubr.f32.mxu0 0.0
    %v293 = vand.u32 %v64, 4294901760
    %v294 = vsub.f32 %v64, %v293
    %295 = vmatmul.mubr.f32.gmra.mrb[0].mxu0 %v294
    %v296 = vpop.f32.mrb[0].mxu0
    %v297 = vadd.f32 %v221, %v296
    %v298 = vpop.f32.mrb[0].mxu0
    %299 = vdwg.mxu0
    %300 = vmatprep.subr.mxu0 0.0
    %v301 = vand.u32 %v60, 4294901760
    %302 = vmatpush1.msra.mxu0 %v301
    %303 = vmatprep.subr.mxu0 0.0
    %v304 = vand.u32 %v61, 4294901760
    %305 = vmatpush1.msra.mxu0 %v304
    %306 = vmatprep.subr.mxu0 0.0
    %307 = vmatpush1.msra.mxu0 0.0
    %308 = vmatprep.subr.mxu0 0.0
    %309 = vmatpush1.msra.mxu0 0.0
    %310 = vmatprep.subr.mxu0 0.0
    %311 = vmatpush1.msra.mxu0 0.0
    %312 = vmatprep.subr.mxu0 0.0
    %313 = vmatpush1.msra.mxu0 0.0
    %314 = vmatprep.subr.mxu0 0.0
    %315 = vmatpush1.msra.mxu0 0.0
    %316 = vmatprep.subr.mxu0 0.0
    %317 = vmatpush1.msra.mxu0 0.0
    %318 = vmatprep.subr.mxu0 0.0
    %319 = vmatpush1.msra.mxu0 0.0
    %320 = vmatprep.subr.mxu0 0.0
    %321 = vmatpush1.msra.mxu0 0.0
    %322 = vmatprep.subr.mxu0 0.0
    %323 = vmatpush1.msra.mxu0 0.0
    %324 = vmatprep.subr.mxu0 0.0
    %325 = vmatpush1.msra.mxu0 0.0
    %326 = vmatprep.subr.mxu0 0.0
    %327 = vmatpush1.msra.mxu0 0.0
    %328 = vmatprep.subr.mxu0 0.0
    %329 = vmatpush1.msra.mxu0 0.0
    %330 = vmatprep.subr.mxu0 0.0
    %331 = vmatpush1.msra.mxu0 0.0
    %332 = vmatprep.subr.mxu0 0.0
    %333 = vmatpush1.msra.mxu0 0.0
    %334 = vmatprep.subr.mxu0 0.0
    %335 = vmatpush1.msra.mxu0 0.0
    %336 = vmatprep.subr.mxu0 0.0
    %337 = vmatpush1.msra.mxu0 0.0
    %338 = vmatprep.subr.mxu0 0.0
    %339 = vmatpush1.msra.mxu0 0.0
    %340 = vmatprep.subr.mxu0 0.0
    %341 = vmatpush1.msra.mxu0 0.0
    %342 = vmatprep.subr.mxu0 0.0
    %343 = vmatpush1.msra.mxu0 0.0
    %344 = vmatprep.subr.mxu0 0.0
    %345 = vmatpush1.msra.mxu0 0.0
    %346 = vmatprep.subr.mxu0 0.0
    %347 = vmatpush1.msra.mxu0 0.0
    %348 = vmatprep.subr.mxu0 0.0
    %349 = vmatpush1.msra.mxu0 0.0
    %350 = vmatprep.subr.mxu0 0.0
    %351 = vmatpush1.msra.mxu0 0.0
    %352 = vmatprep.subr.mxu0 0.0
    %353 = vmatpush1.msra.mxu0 0.0
    %354 = vmatprep.subr.mxu0 0.0
    %355 = vmatpush1.msra.mxu0 0.0
    %356 = vmatprep.subr.mxu0 0.0
    %357 = vmatpush1.msra.mxu0 0.0
    %358 = vmatprep.subr.mxu0 0.0
    %359 = vmatpush1.msra.mxu0 0.0
    %360 = vmatprep.subr.mxu0 0.0
    %361 = vmatpush1.msra.mxu0 0.0
    %362 = vmatprep.subr.mxu0 0.0
    %363 = vmatpush1.msra.mxu0 0.0
    %364 = vmatprep.subr.mxu0 0.0
    %365 = vmatpush1.msra.mxu0 0.0
    %366 = vmatprep.mubr.f32.mxu0 0.0
    %v367 = vand.u32 %v64, 4294901760
    %v368 = vsub.f32 %v64, %v367
    %v369 = vand.u32 %v368, 4294901760
    %370 = vmatmul.mubr.f32.gmra.mrb[0].mxu0 %v369
    %v371 = vpop.f32.mrb[0].mxu0
    %v372 = vadd.f32 %v297, %v371
    %v373 = vpop.f32.mrb[0].mxu0
    %374 = vdwg.mxu0
    %375 = vmatprep.subr.mxu0 0.0
    %v376 = vand.u32 %v60, 4294901760
    %v377 = vsub.f32 %v60, %v376
    %v378 = vand.u32 %v377, 4294901760
    %379 = vmatpush1.msra.mxu0 %v378
    %380 = vmatprep.subr.mxu0 0.0
    %v381 = vand.u32 %v61, 4294901760
    %v382 = vsub.f32 %v61, %v381
    %v383 = vand.u32 %v382, 4294901760
    %384 = vmatpush1.msra.mxu0 %v383
    %385 = vmatprep.subr.mxu0 0.0
    %386 = vmatpush1.msra.mxu0 0.0
    %387 = vmatprep.subr.mxu0 0.0
    %388 = vmatpush1.msra.mxu0 0.0
    %389 = vmatprep.subr.mxu0 0.0
    %390 = vmatpush1.msra.mxu0 0.0
    %391 = vmatprep.subr.mxu0 0.0
    %392 = vmatpush1.msra.mxu0 0.0
    %393 = vmatprep.subr.mxu0 0.0
    %394 = vmatpush1.msra.mxu0 0.0
    %395 = vmatprep.subr.mxu0 0.0
    %396 = vmatpush1.msra.mxu0 0.0
    %397 = vmatprep.subr.mxu0 0.0
    %398 = vmatpush1.msra.mxu0 0.0
    %399 = vmatprep.subr.mxu0 0.0
    %400 = vmatpush1.msra.mxu0 0.0
    %401 = vmatprep.subr.mxu0 0.0
    %402 = vmatpush1.msra.mxu0 0.0
    %403 = vmatprep.subr.mxu0 0.0
    %404 = vmatpush1.msra.mxu0 0.0
    %405 = vmatprep.subr.mxu0 0.0
    %406 = vmatpush1.msra.mxu0 0.0
    %407 = vmatprep.subr.mxu0 0.0
    %408 = vmatpush1.msra.mxu0 0.0
    %409 = vmatprep.subr.mxu0 0.0
    %410 = vmatpush1.msra.mxu0 0.0
    %411 = vmatprep.subr.mxu0 0.0
    %412 = vmatpush1.msra.mxu0 0.0
    %413 = vmatprep.subr.mxu0 0.0
    %414 = vmatpush1.msra.mxu0 0.0
    %415 = vmatprep.subr.mxu0 0.0
    %416 = vmatpush1.msra.mxu0 0.0
    %417 = vmatprep.subr.mxu0 0.0
    %418 = vmatpush1.msra.mxu0 0.0
    %419 = vmatprep.subr.mxu0 0.0
    %420 = vmatpush1.msra.mxu0 0.0
    %421 = vmatprep.subr.mxu0 0.0
    %422 = vmatpush1.msra.mxu0 0.0
    %423 = vmatprep.subr.mxu0 0.0
    %424 = vmatpush1.msra.mxu0 0.0
    %425 = vmatprep.subr.mxu0 0.0
    %426 = vmatpush1.msra.mxu0 0.0
    %427 = vmatprep.subr.mxu0 0.0
    %428 = vmatpush1.msra.mxu0 0.0
    %429 = vmatprep.subr.mxu0 0.0
    %430 = vmatpush1.msra.mxu0 0.0
    %431 = vmatprep.subr.mxu0 0.0
    %432 = vmatpush1.msra.mxu0 0.0
    %433 = vmatprep.subr.mxu0 0.0
    %434 = vmatpush1.msra.mxu0 0.0
    %435 = vmatprep.subr.mxu0 0.0
    %436 = vmatpush1.msra.mxu0 0.0
    %437 = vmatprep.subr.mxu0 0.0
    %438 = vmatpush1.msra.mxu0 0.0
    %439 = vmatprep.subr.mxu0 0.0
    %440 = vmatpush1.msra.mxu0 0.0
    %441 = vmatprep.subr.mxu0 0.0
    %442 = vmatpush1.msra.mxu0 0.0
    %443 = vmatprep.subr.mxu0 0.0
    %444 = vmatpush1.msra.mxu0 0.0
    %445 = vmatprep.mubr.f32.mxu0 0.0
    %v446 = vand.u32 %v64, 4294901760
    %447 = vmatmul.mubr.f32.gmra.mrb[0].mxu0 %v446
    %v448 = vpop.f32.mrb[0].mxu0
    %v449 = vadd.f32 %v372, %v448
    %v450 = vpop.f32.mrb[0].mxu0
    %451 = vdwg.mxu0
    %452 = vmatprep.subr.mxu0 0.0
    %v453 = vand.u32 %v60, 4294901760
    %454 = vmatpush1.msra.mxu0 %v453
    %455 = vmatprep.subr.mxu0 0.0
    %v456 = vand.u32 %v61, 4294901760
    %457 = vmatpush1.msra.mxu0 %v456
    %458 = vmatprep.subr.mxu0 0.0
    %459 = vmatpush1.msra.mxu0 0.0
    %460 = vmatprep.subr.mxu0 0.0
    %461 = vmatpush1.msra.mxu0 0.0
    %462 = vmatprep.subr.mxu0 0.0
    %463 = vmatpush1.msra.mxu0 0.0
    %464 = vmatprep.subr.mxu0 0.0
    %465 = vmatpush1.msra.mxu0 0.0
    %466 = vmatprep.subr.mxu0 0.0
    %467 = vmatpush1.msra.mxu0 0.0
    %468 = vmatprep.subr.mxu0 0.0
    %469 = vmatpush1.msra.mxu0 0.0
    %470 = vmatprep.subr.mxu0 0.0
    %471 = vmatpush1.msra.mxu0 0.0
    %472 = vmatprep.subr.mxu0 0.0
    %473 = vmatpush1.msra.mxu0 0.0
    %474 = vmatprep.subr.mxu0 0.0
    %475 = vmatpush1.msra.mxu0 0.0
    %476 = vmatprep.subr.mxu0 0.0
    %477 = vmatpush1.msra.mxu0 0.0
    %478 = vmatprep.subr.mxu0 0.0
    %479 = vmatpush1.msra.mxu0 0.0
    %480 = vmatprep.subr.mxu0 0.0
    %481 = vmatpush1.msra.mxu0 0.0
    %482 = vmatprep.subr.mxu0 0.0
    %483 = vmatpush1.msra.mxu0 0.0
    %484 = vmatprep.subr.mxu0 0.0
    %485 = vmatpush1.msra.mxu0 0.0
    %486 = vmatprep.subr.mxu0 0.0
    %487 = vmatpush1.msra.mxu0 0.0
    %488 = vmatprep.subr.mxu0 0.0
    %489 = vmatpush1.msra.mxu0 0.0
    %490 = vmatprep.subr.mxu0 0.0
    %491 = vmatpush1.msra.mxu0 0.0
    %492 = vmatprep.subr.mxu0 0.0
    %493 = vmatpush1.msra.mxu0 0.0
    %494 = vmatprep.subr.mxu0 0.0
    %495 = vmatpush1.msra.mxu0 0.0
    %496 = vmatprep.subr.mxu0 0.0
    %497 = vmatpush1.msra.mxu0 0.0
    %498 = vmatprep.subr.mxu0 0.0
    %499 = vmatpush1.msra.mxu0 0.0
    %500 = vmatprep.subr.mxu0 0.0
    %501 = vmatpush1.msra.mxu0 0.0
    %502 = vmatprep.subr.mxu0 0.0
    %503 = vmatpush1.msra.mxu0 0.0
    %504 = vmatprep.subr.mxu0 0.0
    %505 = vmatpush1.msra.mxu0 0.0
    %506 = vmatprep.subr.mxu0 0.0
    %507 = vmatpush1.msra.mxu0 0.0
    %508 = vmatprep.subr.mxu0 0.0
    %509 = vmatpush1.msra.mxu0 0.0
    %510 = vmatprep.subr.mxu0 0.0
    %511 = vmatpush1.msra.mxu0 0.0
    %512 = vmatprep.subr.mxu0 0.0
    %513 = vmatpush1.msra.mxu0 0.0
    %514 = vmatprep.subr.mxu0 0.0
    %515 = vmatpush1.msra.mxu0 0.0
    %516 = vmatprep.subr.mxu0 0.0
    %517 = vmatpush1.msra.mxu0 0.0
    %518 = vmatprep.mubr.f32.mxu0 0.0
    %v519 = vand.u32 %v64, 4294901760
    %520 = vmatmul.mubr.f32.gmra.mrb[0].mxu0 %v519
    %v521 = vpop.f32.mrb[0].mxu0
    %v522 = vadd.f32 %v449, %v521
    %v523 = vpop.f32.mrb[0].mxu0
    %524 = vdwg.mxu0
    %v526 = vsel %vm62, %v56, 0
    %528 = vmatprep.subr.mxu0 0.0
    %v529 = vand.u32 %v57, 4294901760
    %530 = vmatpush1.msra.mxu0 %v529
    %531 = vmatprep.subr.mxu0 0.0
    %v532 = vand.u32 %v58, 4294901760
    %533 = vmatpush1.msra.mxu0 %v532
    %534 = vmatprep.subr.mxu0 0.0
    %535 = vmatpush1.msra.mxu0 0.0
    %536 = vmatprep.subr.mxu0 0.0
    %537 = vmatpush1.msra.mxu0 0.0
    %538 = vmatprep.subr.mxu0 0.0
    %539 = vmatpush1.msra.mxu0 0.0
    %540 = vmatprep.subr.mxu0 0.0
    %541 = vmatpush1.msra.mxu0 0.0
    %542 = vmatprep.subr.mxu0 0.0
    %543 = vmatpush1.msra.mxu0 0.0
    %544 = vmatprep.subr.mxu0 0.0
    %545 = vmatpush1.msra.mxu0 0.0
    %546 = vmatprep.subr.mxu0 0.0
    %547 = vmatpush1.msra.mxu0 0.0
    %548 = vmatprep.subr.mxu0 0.0
    %549 = vmatpush1.msra.mxu0 0.0
    %550 = vmatprep.subr.mxu0 0.0
    %551 = vmatpush1.msra.mxu0 0.0
    %552 = vmatprep.subr.mxu0 0.0
    %553 = vmatpush1.msra.mxu0 0.0
    %554 = vmatprep.subr.mxu0 0.0
    %555 = vmatpush1.msra.mxu0 0.0
    %556 = vmatprep.subr.mxu0 0.0
    %557 = vmatpush1.msra.mxu0 0.0
    %558 = vmatprep.subr.mxu0 0.0
    %559 = vmatpush1.msra.mxu0 0.0
    %560 = vmatprep.subr.mxu0 0.0
    %561 = vmatpush1.msra.mxu0 0.0
    %562 = vmatprep.subr.mxu0 0.0
    %563 = vmatpush1.msra.mxu0 0.0
    %564 = vmatprep.subr.mxu0 0.0
    %565 = vmatpush1.msra.mxu0 0.0
    %566 = vmatprep.subr.mxu0 0.0
    %567 = vmatpush1.msra.mxu0 0.0
    %568 = vmatprep.subr.mxu0 0.0
    %569 = vmatpush1.msra.mxu0 0.0
    %570 = vmatprep.subr.mxu0 0.0
    %571 = vmatpush1.msra.mxu0 0.0
    %572 = vmatprep.subr.mxu0 0.0
    %573 = vmatpush1.msra.mxu0 0.0
    %574 = vmatprep.subr.mxu0 0.0
    %575 = vmatpush1.msra.mxu0 0.0
    %576 = vmatprep.subr.mxu0 0.0
    %577 = vmatpush1.msra.mxu0 0.0
    %578 = vmatprep.subr.mxu0 0.0
    %579 = vmatpush1.msra.mxu0 0.0
    %580 = vmatprep.subr.mxu0 0.0
    %581 = vmatpush1.msra.mxu0 0.0
    %582 = vmatprep.subr.mxu0 0.0
    %583 = vmatpush1.msra.mxu0 0.0
    %584 = vmatprep.subr.mxu0 0.0
    %585 = vmatpush1.msra.mxu0 0.0
    %586 = vmatprep.subr.mxu0 0.0
    %587 = vmatpush1.msra.mxu0 0.0
    %588 = vmatprep.subr.mxu0 0.0
    %589 = vmatpush1.msra.mxu0 0.0
    %590 = vmatprep.subr.mxu0 0.0
    %591 = vmatpush1.msra.mxu0 0.0
    %592 = vmatprep.subr.mxu0 0.0
    %593 = vmatpush1.msra.mxu0 0.0
    %594 = vmatprep.mubr.f32.mxu0 0.0
    %v595 = vand.u32 %v526, 4294901760
    %v596 = vsub.f32 %v526, %v595
    %v597 = vand.u32 %v596, 4294901760
    %v598 = vsub.f32 %v596, %v597
    %v599 = vand.u32 %v598, 4294901760
    %600 = vmatmul.mubr.f32.gmra.mrb[0].mxu0 %v599
    %v601 = vpop.f32.mrb[0].mxu0
    %v602 = vadd.f32 %v522, %v601
    %v603 = vpop.f32.mrb[0].mxu0
    %604 = vdwg.mxu0
    %605 = vmatprep.subr.mxu0 0.0
    %v606 = vand.u32 %v57, 4294901760
    %v607 = vsub.f32 %v57, %v606
    %v608 = vand.u32 %v607, 4294901760
    %v609 = vsub.f32 %v607, %v608
    %v610 = vand.u32 %v609, 4294901760
    %611 = vmatpush1.msra.mxu0 %v610
    %612 = vmatprep.subr.mxu0 0.0
    %v613 = vand.u32 %v58, 4294901760
    %v614 = vsub.f32 %v58, %v613
    %v615 = vand.u32 %v614, 4294901760
    %v616 = vsub.f32 %v614, %v615
    %v617 = vand.u32 %v616, 4294901760
    %618 = vmatpush1.msra.mxu0 %v617
    %619 = vmatprep.subr.mxu0 0.0
    %620 = vmatpush1.msra.mxu0 0.0
    %621 = vmatprep.subr.mxu0 0.0
    %622 = vmatpush1.msra.mxu0 0.0
    %623 = vmatprep.subr.mxu0 0.0
    %624 = vmatpush1.msra.mxu0 0.0
    %625 = vmatprep.subr.mxu0 0.0
    %626 = vmatpush1.msra.mxu0 0.0
    %627 = vmatprep.subr.mxu0 0.0
    %628 = vmatpush1.msra.mxu0 0.0
    %629 = vmatprep.subr.mxu0 0.0
    %630 = vmatpush1.msra.mxu0 0.0
    %631 = vmatprep.subr.mxu0 0.0
    %632 = vmatpush1.msra.mxu0 0.0
    %633 = vmatprep.subr.mxu0 0.0
    %634 = vmatpush1.msra.mxu0 0.0
    %635 = vmatprep.subr.mxu0 0.0
    %636 = vmatpush1.msra.mxu0 0.0
    %637 = vmatprep.subr.mxu0 0.0
    %638 = vmatpush1.msra.mxu0 0.0
    %639 = vmatprep.subr.mxu0 0.0
    %640 = vmatpush1.msra.mxu0 0.0
    %641 = vmatprep.subr.mxu0 0.0
    %642 = vmatpush1.msra.mxu0 0.0
    %643 = vmatprep.subr.mxu0 0.0
    %644 = vmatpush1.msra.mxu0 0.0
    %645 = vmatprep.subr.mxu0 0.0
    %646 = vmatpush1.msra.mxu0 0.0
    %647 = vmatprep.subr.mxu0 0.0
    %648 = vmatpush1.msra.mxu0 0.0
    %649 = vmatprep.subr.mxu0 0.0
    %650 = vmatpush1.msra.mxu0 0.0
    %651 = vmatprep.subr.mxu0 0.0
    %652 = vmatpush1.msra.mxu0 0.0
    %653 = vmatprep.subr.mxu0 0.0
    %654 = vmatpush1.msra.mxu0 0.0
    %655 = vmatprep.subr.mxu0 0.0
    %656 = vmatpush1.msra.mxu0 0.0
    %657 = vmatprep.subr.mxu0 0.0
    %658 = vmatpush1.msra.mxu0 0.0
    %659 = vmatprep.subr.mxu0 0.0
    %660 = vmatpush1.msra.mxu0 0.0
    %661 = vmatprep.subr.mxu0 0.0
    %662 = vmatpush1.msra.mxu0 0.0
    %663 = vmatprep.subr.mxu0 0.0
    %664 = vmatpush1.msra.mxu0 0.0
    %665 = vmatprep.subr.mxu0 0.0
    %666 = vmatpush1.msra.mxu0 0.0
    %667 = vmatprep.subr.mxu0 0.0
    %668 = vmatpush1.msra.mxu0 0.0
    %669 = vmatprep.subr.mxu0 0.0
    %670 = vmatpush1.msra.mxu0 0.0
    %671 = vmatprep.subr.mxu0 0.0
    %672 = vmatpush1.msra.mxu0 0.0
    %673 = vmatprep.subr.mxu0 0.0
    %674 = vmatpush1.msra.mxu0 0.0
    %675 = vmatprep.subr.mxu0 0.0
    %676 = vmatpush1.msra.mxu0 0.0
    %677 = vmatprep.subr.mxu0 0.0
    %678 = vmatpush1.msra.mxu0 0.0
    %679 = vmatprep.mubr.f32.mxu0 0.0
    %v680 = vand.u32 %v526, 4294901760
    %681 = vmatmul.mubr.f32.gmra.mrb[0].mxu0 %v680
    %v682 = vpop.f32.mrb[0].mxu0
    %v683 = vadd.f32 %v602, %v682
    %v684 = vpop.f32.mrb[0].mxu0
    %685 = vdwg.mxu0
    %686 = vmatprep.subr.mxu0 0.0
    %v687 = vand.u32 %v57, 4294901760
    %v688 = vsub.f32 %v57, %v687
    %689 = vmatpush1.msra.mxu0 %v688
    %690 = vmatprep.subr.mxu0 0.0
    %v691 = vand.u32 %v58, 4294901760
    %v692 = vsub.f32 %v58, %v691
    %693 = vmatpush1.msra.mxu0 %v692
    %694 = vmatprep.subr.mxu0 0.0
    %695 = vmatpush1.msra.mxu0 0.0
    %696 = vmatprep.subr.mxu0 0.0
    %697 = vmatpush1.msra.mxu0 0.0
    %698 = vmatprep.subr.mxu0 0.0
    %699 = vmatpush1.msra.mxu0 0.0
    %700 = vmatprep.subr.mxu0 0.0
    %701 = vmatpush1.msra.mxu0 0.0
    %702 = vmatprep.subr.mxu0 0.0
    %703 = vmatpush1.msra.mxu0 0.0
    %704 = vmatprep.subr.mxu0 0.0
    %705 = vmatpush1.msra.mxu0 0.0
    %706 = vmatprep.subr.mxu0 0.0
    %707 = vmatpush1.msra.mxu0 0.0
    %708 = vmatprep.subr.mxu0 0.0
    %709 = vmatpush1.msra.mxu0 0.0
    %710 = vmatprep.subr.mxu0 0.0
    %711 = vmatpush1.msra.mxu0 0.0
    %712 = vmatprep.subr.mxu0 0.0
    %713 = vmatpush1.msra.mxu0 0.0
    %714 = vmatprep.subr.mxu0 0.0
    %715 = vmatpush1.msra.mxu0 0.0
    %716 = vmatprep.subr.mxu0 0.0
    %717 = vmatpush1.msra.mxu0 0.0
    %718 = vmatprep.subr.mxu0 0.0
    %719 = vmatpush1.msra.mxu0 0.0
    %720 = vmatprep.subr.mxu0 0.0
    %721 = vmatpush1.msra.mxu0 0.0
    %722 = vmatprep.subr.mxu0 0.0
    %723 = vmatpush1.msra.mxu0 0.0
    %724 = vmatprep.subr.mxu0 0.0
    %725 = vmatpush1.msra.mxu0 0.0
    %726 = vmatprep.subr.mxu0 0.0
    %727 = vmatpush1.msra.mxu0 0.0
    %728 = vmatprep.subr.mxu0 0.0
    %729 = vmatpush1.msra.mxu0 0.0
    %730 = vmatprep.subr.mxu0 0.0
    %731 = vmatpush1.msra.mxu0 0.0
    %732 = vmatprep.subr.mxu0 0.0
    %733 = vmatpush1.msra.mxu0 0.0
    %734 = vmatprep.subr.mxu0 0.0
    %735 = vmatpush1.msra.mxu0 0.0
    %736 = vmatprep.subr.mxu0 0.0
    %737 = vmatpush1.msra.mxu0 0.0
    %738 = vmatprep.subr.mxu0 0.0
    %739 = vmatpush1.msra.mxu0 0.0
    %740 = vmatprep.subr.mxu0 0.0
    %741 = vmatpush1.msra.mxu0 0.0
    %742 = vmatprep.subr.mxu0 0.0
    %743 = vmatpush1.msra.mxu0 0.0
    %744 = vmatprep.subr.mxu0 0.0
    %745 = vmatpush1.msra.mxu0 0.0
    %746 = vmatprep.subr.mxu0 0.0
    %747 = vmatpush1.msra.mxu0 0.0
    %748 = vmatprep.subr.mxu0 0.0
    %749 = vmatpush1.msra.mxu0 0.0
    %750 = vmatprep.subr.mxu0 0.0
    %751 = vmatpush1.msra.mxu0 0.0
    %752 = vmatprep.subr.mxu0 0.0
    %753 = vmatpush1.msra.mxu0 0.0
    %754 = vmatprep.mubr.f32.mxu0 0.0
    %v755 = vand.u32 %v526, 4294901760
    %v756 = vsub.f32 %v526, %v755
    %757 = vmatmul.mubr.f32.gmra.mrb[0].mxu0 %v756
    %v758 = vpop.f32.mrb[0].mxu0
    %v759 = vadd.f32 %v683, %v758
    %v760 = vpop.f32.mrb[0].mxu0
    %761 = vdwg.mxu0
    %762 = vmatprep.subr.mxu0 0.0
    %v763 = vand.u32 %v57, 4294901760
    %764 = vmatpush1.msra.mxu0 %v763
    %765 = vmatprep.subr.mxu0 0.0
    %v766 = vand.u32 %v58, 4294901760
    %767 = vmatpush1.msra.mxu0 %v766
    %768 = vmatprep.subr.mxu0 0.0
    %769 = vmatpush1.msra.mxu0 0.0
    %770 = vmatprep.subr.mxu0 0.0
    %771 = vmatpush1.msra.mxu0 0.0
    %772 = vmatprep.subr.mxu0 0.0
    %773 = vmatpush1.msra.mxu0 0.0
    %774 = vmatprep.subr.mxu0 0.0
    %775 = vmatpush1.msra.mxu0 0.0
    %776 = vmatprep.subr.mxu0 0.0
    %777 = vmatpush1.msra.mxu0 0.0
    %778 = vmatprep.subr.mxu0 0.0
    %779 = vmatpush1.msra.mxu0 0.0
    %780 = vmatprep.subr.mxu0 0.0
    %781 = vmatpush1.msra.mxu0 0.0
    %782 = vmatprep.subr.mxu0 0.0
    %783 = vmatpush1.msra.mxu0 0.0
    %784 = vmatprep.subr.mxu0 0.0
    %785 = vmatpush1.msra.mxu0 0.0
    %786 = vmatprep.subr.mxu0 0.0
    %787 = vmatpush1.msra.mxu0 0.0
    %788 = vmatprep.subr.mxu0 0.0
    %789 = vmatpush1.msra.mxu0 0.0
    %790 = vmatprep.subr.mxu0 0.0
    %791 = vmatpush1.msra.mxu0 0.0
    %792 = vmatprep.subr.mxu0 0.0
    %793 = vmatpush1.msra.mxu0 0.0
    %794 = vmatprep.subr.mxu0 0.0
    %795 = vmatpush1.msra.mxu0 0.0
    %796 = vmatprep.subr.mxu0 0.0
    %797 = vmatpush1.msra.mxu0 0.0
    %798 = vmatprep.subr.mxu0 0.0
    %799 = vmatpush1.msra.mxu0 0.0
    %800 = vmatprep.subr.mxu0 0.0
    %801 = vmatpush1.msra.mxu0 0.0
    %802 = vmatprep.subr.mxu0 0.0
    %803 = vmatpush1.msra.mxu0 0.0
    %804 = vmatprep.subr.mxu0 0.0
    %805 = vmatpush1.msra.mxu0 0.0
    %806 = vmatprep.subr.mxu0 0.0
    %807 = vmatpush1.msra.mxu0 0.0
    %808 = vmatprep.subr.mxu0 0.0
    %809 = vmatpush1.msra.mxu0 0.0
    %810 = vmatprep.subr.mxu0 0.0
    %811 = vmatpush1.msra.mxu0 0.0
    %812 = vmatprep.subr.mxu0 0.0
    %813 = vmatpush1.msra.mxu0 0.0
    %814 = vmatprep.subr.mxu0 0.0
    %815 = vmatpush1.msra.mxu0 0.0
    %816 = vmatprep.subr.mxu0 0.0
    %817 = vmatpush1.msra.mxu0 0.0
    %818 = vmatprep.subr.mxu0 0.0
    %819 = vmatpush1.msra.mxu0 0.0
    %820 = vmatprep.subr.mxu0 0.0
    %821 = vmatpush1.msra.mxu0 0.0
    %822 = vmatprep.subr.mxu0 0.0
    %823 = vmatpush1.msra.mxu0 0.0
    %824 = vmatprep.subr.mxu0 0.0
    %825 = vmatpush1.msra.mxu0 0.0
    %826 = vmatprep.subr.mxu0 0.0
    %827 = vmatpush1.msra.mxu0 0.0
    %828 = vmatprep.mubr.f32.mxu0 0.0
    %v829 = vand.u32 %v526, 4294901760
    %v830 = vsub.f32 %v526, %v829
    %v831 = vand.u32 %v830, 4294901760
    %832 = vmatmul.mubr.f32.gmra.mrb[0].mxu0 %v831
    %v833 = vpop.f32.mrb[0].mxu0
    %v834 = vadd.f32 %v759, %v833
    %v835 = vpop.f32.mrb[0].mxu0
    %836 = vdwg.mxu0
    %837 = vmatprep.subr.mxu0 0.0
    %v838 = vand.u32 %v57, 4294901760
    %v839 = vsub.f32 %v57, %v838
    %v840 = vand.u32 %v839, 4294901760
    %841 = vmatpush1.msra.mxu0 %v840
    %842 = vmatprep.subr.mxu0 0.0
    %v843 = vand.u32 %v58, 4294901760
    %v844 = vsub.f32 %v58, %v843
    %v845 = vand.u32 %v844, 4294901760
    %846 = vmatpush1.msra.mxu0 %v845
    %847 = vmatprep.subr.mxu0 0.0
    %848 = vmatpush1.msra.mxu0 0.0
    %849 = vmatprep.subr.mxu0 0.0
    %850 = vmatpush1.msra.mxu0 0.0
    %851 = vmatprep.subr.mxu0 0.0
    %852 = vmatpush1.msra.mxu0 0.0
    %853 = vmatprep.subr.mxu0 0.0
    %854 = vmatpush1.msra.mxu0 0.0
    %855 = vmatprep.subr.mxu0 0.0
    %856 = vmatpush1.msra.mxu0 0.0
    %857 = vmatprep.subr.mxu0 0.0
    %858 = vmatpush1.msra.mxu0 0.0
    %859 = vmatprep.subr.mxu0 0.0
    %860 = vmatpush1.msra.mxu0 0.0
    %861 = vmatprep.subr.mxu0 0.0
    %862 = vmatpush1.msra.mxu0 0.0
    %863 = vmatprep.subr.mxu0 0.0
    %864 = vmatpush1.msra.mxu0 0.0
    %865 = vmatprep.subr.mxu0 0.0
    %866 = vmatpush1.msra.mxu0 0.0
    %867 = vmatprep.subr.mxu0 0.0
    %868 = vmatpush1.msra.mxu0 0.0
    %869 = vmatprep.subr.mxu0 0.0
    %870 = vmatpush1.msra.mxu0 0.0
    %871 = vmatprep.subr.mxu0 0.0
    %872 = vmatpush1.msra.mxu0 0.0
    %873 = vmatprep.subr.mxu0 0.0
    %874 = vmatpush1.msra.mxu0 0.0
    %875 = vmatprep.subr.mxu0 0.0
    %876 = vmatpush1.msra.mxu0 0.0
    %877 = vmatprep.subr.mxu0 0.0
    %878 = vmatpush1.msra.mxu0 0.0
    %879 = vmatprep.subr.mxu0 0.0
    %880 = vmatpush1.msra.mxu0 0.0
    %881 = vmatprep.subr.mxu0 0.0
    %882 = vmatpush1.msra.mxu0 0.0
    %883 = vmatprep.subr.mxu0 0.0
    %884 = vmatpush1.msra.mxu0 0.0
    %885 = vmatprep.subr.mxu0 0.0
    %886 = vmatpush1.msra.mxu0 0.0
    %887 = vmatprep.subr.mxu0 0.0
    %888 = vmatpush1.msra.mxu0 0.0
    %889 = vmatprep.subr.mxu0 0.0
    %890 = vmatpush1.msra.mxu0 0.0
    %891 = vmatprep.subr.mxu0 0.0
    %892 = vmatpush1.msra.mxu0 0.0
    %893 = vmatprep.subr.mxu0 0.0
    %894 = vmatpush1.msra.mxu0 0.0
    %895 = vmatprep.subr.mxu0 0.0
    %896 = vmatpush1.msra.mxu0 0.0
    %897 = vmatprep.subr.mxu0 0.0
    %898 = vmatpush1.msra.mxu0 0.0
    %899 = vmatprep.subr.mxu0 0.0
    %900 = vmatpush1.msra.mxu0 0.0
    %901 = vmatprep.subr.mxu0 0.0
    %902 = vmatpush1.msra.mxu0 0.0
    %903 = vmatprep.subr.mxu0 0.0
    %904 = vmatpush1.msra.mxu0 0.0
    %905 = vmatprep.subr.mxu0 0.0
    %906 = vmatpush1.msra.mxu0 0.0
    %907 = vmatprep.mubr.f32.mxu0 0.0
    %v908 = vand.u32 %v526, 4294901760
    %909 = vmatmul.mubr.f32.gmra.mrb[0].mxu0 %v908
    %v910 = vpop.f32.mrb[0].mxu0
    %v911 = vadd.f32 %v834, %v910
    %v912 = vpop.f32.mrb[0].mxu0
    %913 = vdwg.mxu0
    %914 = vmatprep.subr.mxu0 0.0
    %v915 = vand.u32 %v57, 4294901760
    %916 = vmatpush1.msra.mxu0 %v915
    %917 = vmatprep.subr.mxu0 0.0
    %v918 = vand.u32 %v58, 4294901760
    %919 = vmatpush1.msra.mxu0 %v918
    %920 = vmatprep.subr.mxu0 0.0
    %921 = vmatpush1.msra.mxu0 0.0
    %922 = vmatprep.subr.mxu0 0.0
    %923 = vmatpush1.msra.mxu0 0.0
    %924 = vmatprep.subr.mxu0 0.0
    %925 = vmatpush1.msra.mxu0 0.0
    %926 = vmatprep.subr.mxu0 0.0
    %927 = vmatpush1.msra.mxu0 0.0
    %928 = vmatprep.subr.mxu0 0.0
    %929 = vmatpush1.msra.mxu0 0.0
    %930 = vmatprep.subr.mxu0 0.0
    %931 = vmatpush1.msra.mxu0 0.0
    %932 = vmatprep.subr.mxu0 0.0
    %933 = vmatpush1.msra.mxu0 0.0
    %934 = vmatprep.subr.mxu0 0.0
    %935 = vmatpush1.msra.mxu0 0.0
    %936 = vmatprep.subr.mxu0 0.0
    %937 = vmatpush1.msra.mxu0 0.0
    %938 = vmatprep.subr.mxu0 0.0
    %939 = vmatpush1.msra.mxu0 0.0
    %940 = vmatprep.subr.mxu0 0.0
    %941 = vmatpush1.msra.mxu0 0.0
    %942 = vmatprep.subr.mxu0 0.0
    %943 = vmatpush1.msra.mxu0 0.0
    %944 = vmatprep.subr.mxu0 0.0
    %945 = vmatpush1.msra.mxu0 0.0
    %946 = vmatprep.subr.mxu0 0.0
    %947 = vmatpush1.msra.mxu0 0.0
    %948 = vmatprep.subr.mxu0 0.0
    %949 = vmatpush1.msra.mxu0 0.0
    %950 = vmatprep.subr.mxu0 0.0
    %951 = vmatpush1.msra.mxu0 0.0
    %952 = vmatprep.subr.mxu0 0.0
    %953 = vmatpush1.msra.mxu0 0.0
    %954 = vmatprep.subr.mxu0 0.0
    %955 = vmatpush1.msra.mxu0 0.0
    %956 = vmatprep.subr.mxu0 0.0
    %957 = vmatpush1.msra.mxu0 0.0
    %958 = vmatprep.subr.mxu0 0.0
    %959 = vmatpush1.msra.mxu0 0.0
    %960 = vmatprep.subr.mxu0 0.0
    %961 = vmatpush1.msra.mxu0 0.0
    %962 = vmatprep.subr.mxu0 0.0
    %963 = vmatpush1.msra.mxu0 0.0
    %964 = vmatprep.subr.mxu0 0.0
    %965 = vmatpush1.msra.mxu0 0.0
    %966 = vmatprep.subr.mxu0 0.0
    %967 = vmatpush1.msra.mxu0 0.0
    %968 = vmatprep.subr.mxu0 0.0
    %969 = vmatpush1.msra.mxu0 0.0
    %970 = vmatprep.subr.mxu0 0.0
    %971 = vmatpush1.msra.mxu0 0.0
    %972 = vmatprep.subr.mxu0 0.0
    %973 = vmatpush1.msra.mxu0 0.0
    %974 = vmatprep.subr.mxu0 0.0
    %975 = vmatpush1.msra.mxu0 0.0
    %976 = vmatprep.subr.mxu0 0.0
    %977 = vmatpush1.msra.mxu0 0.0
    %978 = vmatprep.subr.mxu0 0.0
    %979 = vmatpush1.msra.mxu0 0.0
    %980 = vmatprep.mubr.f32.mxu0 0.0
    %v981 = vand.u32 %v526, 4294901760
    %982 = vmatmul.mubr.f32.gmra.mrb[0].mxu0 %v981
    %v983 = vpop.f32.mrb[0].mxu0
    %v984 = vadd.f32 %v911, %v983
    %v985 = vpop.f32.mrb[0].mxu0
    %986 = vdwg.mxu0
    %v987 = vld [vmem:[%s4] sm:$0x1]
    %v989 = vlaneseq
    %v990 = vshrl.u32 %v989, 7
    %v991 = vsub.s32 0, %v990
    %v992 = vrot.slane %v987, %v991
    %v994 = vadd.f32 %v984, %v992
    %v995 = vmax.f32 %v994, 0.0
    %v996 = vld [vmem:[%s5] sm:$0xff]
    %vm997 = vcmask 261120
    %v999 = vsel %vm997, %v996, 0
    %v1002 = vsel %vm997, %v995, 0
    %1004 = vmatprep.subr.mxu0 0.0
    %v1005 = vand.u32 %v1002, 4294901760
    %1006 = vmatpush1.xpose.msra.mxu0 %v1005
    %1007 = vmatprep.subr.mxu0 0.0
    %1008 = vmatpush1.xpose.msra.mxu0 0.0
    %1009 = vmatprep.subr.mxu0 0.0
    %1010 = vmatpush1.xpose.msra.mxu0 0.0
    %1011 = vmatprep.subr.mxu0 0.0
    %1012 = vmatpush1.xpose.msra.mxu0 0.0
    %1013 = vmatprep.subr.mxu0 0.0
    %1014 = vmatpush1.xpose.msra.mxu0 0.0
    %1015 = vmatprep.subr.mxu0 0.0
    %1016 = vmatpush1.xpose.msra.mxu0 0.0
    %1017 = vmatprep.subr.mxu0 0.0
    %1018 = vmatpush1.xpose.msra.mxu0 0.0
    %1019 = vmatprep.subr.mxu0 0.0
    %1020 = vmatpush1.xpose.msra.mxu0 0.0
    %1021 = vmatprep.subr.mxu0 0.0
    %1022 = vmatpush1.xpose.msra.mxu0 0.0
    %1023 = vmatprep.subr.mxu0 0.0
    %1024 = vmatpush1.xpose.msra.mxu0 0.0
    %1025 = vmatprep.subr.mxu0 0.0
    %1026 = vmatpush1.xpose.msra.mxu0 0.0
    %1027 = vmatprep.subr.mxu0 0.0
    %1028 = vmatpush1.xpose.msra.mxu0 0.0
    %1029 = vmatprep.subr.mxu0 0.0
    %1030 = vmatpush1.xpose.msra.mxu0 0.0
    %1031 = vmatprep.subr.mxu0 0.0
    %1032 = vmatpush1.xpose.msra.mxu0 0.0
    %1033 = vmatprep.subr.mxu0 0.0
    %1034 = vmatpush1.xpose.msra.mxu0 0.0
    %1035 = vmatprep.subr.mxu0 0.0
    %1036 = vmatpush1.xpose.msra.mxu0 0.0
    %1037 = vmatprep.subr.mxu0 0.0
    %1038 = vmatpush1.xpose.msra.mxu0 0.0
    %1039 = vmatprep.subr.mxu0 0.0
    %1040 = vmatpush1.xpose.msra.mxu0 0.0
    %1041 = vmatprep.subr.mxu0 0.0
    %1042 = vmatpush1.xpose.msra.mxu0 0.0
    %1043 = vmatprep.subr.mxu0 0.0
    %1044 = vmatpush1.xpose.msra.mxu0 0.0
    %1045 = vmatprep.subr.mxu0 0.0
    %1046 = vmatpush1.xpose.msra.mxu0 0.0
    %1047 = vmatprep.subr.mxu0 0.0
    %1048 = vmatpush1.xpose.msra.mxu0 0.0
    %1049 = vmatprep.subr.mxu0 0.0
    %1050 = vmatpush1.xpose.msra.mxu0 0.0
    %1051 = vmatprep.subr.mxu0 0.0
    %1052 = vmatpush1.xpose.msra.mxu0 0.0
    %1053 = vmatprep.subr.mxu0 0.0
    %1054 = vmatpush1.xpose.msra.mxu0 0.0
    %1055 = vmatprep.subr.mxu0 0.0
    %1056 = vmatpush1.xpose.msra.mxu0 0.0
    %1057 = vmatprep.subr.mxu0 0.0
    %1058 = vmatpush1.xpose.msra.mxu0 0.0
    %1059 = vmatprep.subr.mxu0 0.0
    %1060 = vmatpush1.xpose.msra.mxu0 0.0
    %1061 = vmatprep.subr.mxu0 0.0
    %1062 = vmatpush1.xpose.msra.mxu0 0.0
    %1063 = vmatprep.subr.mxu0 0.0
    %1064 = vmatpush1.xpose.msra.mxu0 0.0
    %1065 = vmatprep.subr.mxu0 0.0
    %1066 = vmatpush1.xpose.msra.mxu0 0.0
    %1067 = vmatprep.subr.mxu0 0.0
    %1068 = vmatpush1.xpose.msra.mxu0 0.0
    %1069 = vmatprep.mubr.f32.mxu0 0.0
    %v1070 = vand.u32 %v999, 4294901760
    %v1071 = vsub.f32 %v999, %v1070
    %v1072 = vand.u32 %v1071, 4294901760
    %v1073 = vsub.f32 %v1071, %v1072
    %v1074 = vand.u32 %v1073, 4294901760
    %1075 = vmatmul.mubr.f32.gmra.mrb[0].mxu0 %v1074
    %v1076 = vpop.f32.mrb[0].mxu0
    %v1077 = vadd.f32 0.0, %v1076
    %v1078 = vpop.f32.mrb[0].mxu0
    %1079 = vdwg.mxu0
    %1080 = vmatprep.subr.mxu0 0.0
    %v1081 = vand.u32 %v1002, 4294901760
    %v1082 = vsub.f32 %v1002, %v1081
    %v1083 = vand.u32 %v1082, 4294901760
    %v1084 = vsub.f32 %v1082, %v1083
    %v1085 = vand.u32 %v1084, 4294901760
    %1086 = vmatpush1.xpose.msra.mxu0 %v1085
    %1087 = vmatprep.subr.mxu0 0.0
    %1088 = vmatpush1.xpose.msra.mxu0 0.0
    %1089 = vmatprep.subr.mxu0 0.0
    %1090 = vmatpush1.xpose.msra.mxu0 0.0
    %1091 = vmatprep.subr.mxu0 0.0
    %1092 = vmatpush1.xpose.msra.mxu0 0.0
    %1093 = vmatprep.subr.mxu0 0.0
    %1094 = vmatpush1.xpose.msra.mxu0 0.0
    %1095 = vmatprep.subr.mxu0 0.0
    %1096 = vmatpush1.xpose.msra.mxu0 0.0
    %1097 = vmatprep.subr.mxu0 0.0
    %1098 = vmatpush1.xpose.msra.mxu0 0.0
    %1099 = vmatprep.subr.mxu0 0.0
    %1100 = vmatpush1.xpose.msra.mxu0 0.0
    %1101 = vmatprep.subr.mxu0 0.0
    %1102 = vmatpush1.xpose.msra.mxu0 0.0
    %1103 = vmatprep.subr.mxu0 0.0
    %1104 = vmatpush1.xpose.msra.mxu0 0.0
    %1105 = vmatprep.subr.mxu0 0.0
    %1106 = vmatpush1.xpose.msra.mxu0 0.0
    %1107 = vmatprep.subr.mxu0 0.0
    %1108 = vmatpush1.xpose.msra.mxu0 0.0
    %1109 = vmatprep.subr.mxu0 0.0
    %1110 = vmatpush1.xpose.msra.mxu0 0.0
    %1111 = vmatprep.subr.mxu0 0.0
    %1112 = vmatpush1.xpose.msra.mxu0 0.0
    %1113 = vmatprep.subr.mxu0 0.0
    %1114 = vmatpush1.xpose.msra.mxu0 0.0
    %1115 = vmatprep.subr.mxu0 0.0
    %1116 = vmatpush1.xpose.msra.mxu0 0.0
    %1117 = vmatprep.subr.mxu0 0.0
    %1118 = vmatpush1.xpose.msra.mxu0 0.0
    %1119 = vmatprep.subr.mxu0 0.0
    %1120 = vmatpush1.xpose.msra.mxu0 0.0
    %1121 = vmatprep.subr.mxu0 0.0
    %1122 = vmatpush1.xpose.msra.mxu0 0.0
    %1123 = vmatprep.subr.mxu0 0.0
    %1124 = vmatpush1.xpose.msra.mxu0 0.0
    %1125 = vmatprep.subr.mxu0 0.0
    %1126 = vmatpush1.xpose.msra.mxu0 0.0
    %1127 = vmatprep.subr.mxu0 0.0
    %1128 = vmatpush1.xpose.msra.mxu0 0.0
    %1129 = vmatprep.subr.mxu0 0.0
    %1130 = vmatpush1.xpose.msra.mxu0 0.0
    %1131 = vmatprep.subr.mxu0 0.0
    %1132 = vmatpush1.xpose.msra.mxu0 0.0
    %1133 = vmatprep.subr.mxu0 0.0
    %1134 = vmatpush1.xpose.msra.mxu0 0.0
    %1135 = vmatprep.subr.mxu0 0.0
    %1136 = vmatpush1.xpose.msra.mxu0 0.0
    %1137 = vmatprep.subr.mxu0 0.0
    %1138 = vmatpush1.xpose.msra.mxu0 0.0
    %1139 = vmatprep.subr.mxu0 0.0
    %1140 = vmatpush1.xpose.msra.mxu0 0.0
    %1141 = vmatprep.subr.mxu0 0.0
    %1142 = vmatpush1.xpose.msra.mxu0 0.0
    %1143 = vmatprep.subr.mxu0 0.0
    %1144 = vmatpush1.xpose.msra.mxu0 0.0
    %1145 = vmatprep.subr.mxu0 0.0
    %1146 = vmatpush1.xpose.msra.mxu0 0.0
    %1147 = vmatprep.subr.mxu0 0.0
    %1148 = vmatpush1.xpose.msra.mxu0 0.0
    %1149 = vmatprep.mubr.f32.mxu0 0.0
    %v1150 = vand.u32 %v999, 4294901760
    %1151 = vmatmul.mubr.f32.gmra.mrb[0].mxu0 %v1150
    %v1152 = vpop.f32.mrb[0].mxu0
    %v1153 = vadd.f32 %v1077, %v1152
    %v1154 = vpop.f32.mrb[0].mxu0
    %1155 = vdwg.mxu0
    %1156 = vmatprep.subr.mxu0 0.0
    %v1157 = vand.u32 %v1002, 4294901760
    %v1158 = vsub.f32 %v1002, %v1157
    %1159 = vmatpush1.xpose.msra.mxu0 %v1158
    %1160 = vmatprep.subr.mxu0 0.0
    %1161 = vmatpush1.xpose.msra.mxu0 0.0
    %1162 = vmatprep.subr.mxu0 0.0
    %1163 = vmatpush1.xpose.msra.mxu0 0.0
    %1164 = vmatprep.subr.mxu0 0.0
    %1165 = vmatpush1.xpose.msra.mxu0 0.0
    %1166 = vmatprep.subr.mxu0 0.0
    %1167 = vmatpush1.xpose.msra.mxu0 0.0
    %1168 = vmatprep.subr.mxu0 0.0
    %1169 = vmatpush1.xpose.msra.mxu0 0.0
    %1170 = vmatprep.subr.mxu0 0.0
    %1171 = vmatpush1.xpose.msra.mxu0 0.0
    %1172 = vmatprep.subr.mxu0 0.0
    %1173 = vmatpush1.xpose.msra.mxu0 0.0
    %1174 = vmatprep.subr.mxu0 0.0
    %1175 = vmatpush1.xpose.msra.mxu0 0.0
    %1176 = vmatprep.subr.mxu0 0.0
    %1177 = vmatpush1.xpose.msra.mxu0 0.0
    %1178 = vmatprep.subr.mxu0 0.0
    %1179 = vmatpush1.xpose.msra.mxu0 0.0
    %1180 = vmatprep.subr.mxu0 0.0
    %1181 = vmatpush1.xpose.msra.mxu0 0.0
    %1182 = vmatprep.subr.mxu0 0.0
    %1183 = vmatpush1.xpose.msra.mxu0 0.0
    %1184 = vmatprep.subr.mxu0 0.0
    %1185 = vmatpush1.xpose.msra.mxu0 0.0
    %1186 = vmatprep.subr.mxu0 0.0
    %1187 = vmatpush1.xpose.msra.mxu0 0.0
    %1188 = vmatprep.subr.mxu0 0.0
    %1189 = vmatpush1.xpose.msra.mxu0 0.0
    %1190 = vmatprep.subr.mxu0 0.0
    %1191 = vmatpush1.xpose.msra.mxu0 0.0
    %1192 = vmatprep.subr.mxu0 0.0
    %1193 = vmatpush1.xpose.msra.mxu0 0.0
    %1194 = vmatprep.subr.mxu0 0.0
    %1195 = vmatpush1.xpose.msra.mxu0 0.0
    %1196 = vmatprep.subr.mxu0 0.0
    %1197 = vmatpush1.xpose.msra.mxu0 0.0
    %1198 = vmatprep.subr.mxu0 0.0
    %1199 = vmatpush1.xpose.msra.mxu0 0.0
    %1200 = vmatprep.subr.mxu0 0.0
    %1201 = vmatpush1.xpose.msra.mxu0 0.0
    %1202 = vmatprep.subr.mxu0 0.0
    %1203 = vmatpush1.xpose.msra.mxu0 0.0
    %1204 = vmatprep.subr.mxu0 0.0
    %1205 = vmatpush1.xpose.msra.mxu0 0.0
    %1206 = vmatprep.subr.mxu0 0.0
    %1207 = vmatpush1.xpose.msra.mxu0 0.0
    %1208 = vmatprep.subr.mxu0 0.0
    %1209 = vmatpush1.xpose.msra.mxu0 0.0
    %1210 = vmatprep.subr.mxu0 0.0
    %1211 = vmatpush1.xpose.msra.mxu0 0.0
    %1212 = vmatprep.subr.mxu0 0.0
    %1213 = vmatpush1.xpose.msra.mxu0 0.0
    %1214 = vmatprep.subr.mxu0 0.0
    %1215 = vmatpush1.xpose.msra.mxu0 0.0
    %1216 = vmatprep.subr.mxu0 0.0
    %1217 = vmatpush1.xpose.msra.mxu0 0.0
    %1218 = vmatprep.subr.mxu0 0.0
    %1219 = vmatpush1.xpose.msra.mxu0 0.0
    %1220 = vmatprep.subr.mxu0 0.0
    %1221 = vmatpush1.xpose.msra.mxu0 0.0
    %1222 = vmatprep.mubr.f32.mxu0 0.0
    %v1223 = vand.u32 %v999, 4294901760
    %v1224 = vsub.f32 %v999, %v1223
    %1225 = vmatmul.mubr.f32.gmra.mrb[0].mxu0 %v1224
    %v1226 = vpop.f32.mrb[0].mxu0
    %v1227 = vadd.f32 %v1153, %v1226
    %v1228 = vpop.f32.mrb[0].mxu0
    %1229 = vdwg.mxu0
    %1230 = vmatprep.subr.mxu0 0.0
    %v1231 = vand.u32 %v1002, 4294901760
    %1232 = vmatpush1.xpose.msra.mxu0 %v1231
    %1233 = vmatprep.subr.mxu0 0.0
    %1234 = vmatpush1.xpose.msra.mxu0 0.0
    %1235 = vmatprep.subr.mxu0 0.0
    %1236 = vmatpush1.xpose.msra.mxu0 0.0
    %1237 = vmatprep.subr.mxu0 0.0
    %1238 = vmatpush1.xpose.msra.mxu0 0.0
    %1239 = vmatprep.subr.mxu0 0.0
    %1240 = vmatpush1.xpose.msra.mxu0 0.0
    %1241 = vmatprep.subr.mxu0 0.0
    %1242 = vmatpush1.xpose.msra.mxu0 0.0
    %1243 = vmatprep.subr.mxu0 0.0
    %1244 = vmatpush1.xpose.msra.mxu0 0.0
    %1245 = vmatprep.subr.mxu0 0.0
    %1246 = vmatpush1.xpose.msra.mxu0 0.0
    %1247 = vmatprep.subr.mxu0 0.0
    %1248 = vmatpush1.xpose.msra.mxu0 0.0
    %1249 = vmatprep.subr.mxu0 0.0
    %1250 = vmatpush1.xpose.msra.mxu0 0.0
    %1251 = vmatprep.subr.mxu0 0.0
    %1252 = vmatpush1.xpose.msra.mxu0 0.0
    %1253 = vmatprep.subr.mxu0 0.0
    %1254 = vmatpush1.xpose.msra.mxu0 0.0
    %1255 = vmatprep.subr.mxu0 0.0
    %1256 = vmatpush1.xpose.msra.mxu0 0.0
    %1257 = vmatprep.subr.mxu0 0.0
    %1258 = vmatpush1.xpose.msra.mxu0 0.0
    %1259 = vmatprep.subr.mxu0 0.0
    %1260 = vmatpush1.xpose.msra.mxu0 0.0
    %1261 = vmatprep.subr.mxu0 0.0
    %1262 = vmatpush1.xpose.msra.mxu0 0.0
    %1263 = vmatprep.subr.mxu0 0.0
    %1264 = vmatpush1.xpose.msra.mxu0 0.0
    %1265 = vmatprep.subr.mxu0 0.0
    %1266 = vmatpush1.xpose.msra.mxu0 0.0
    %1267 = vmatprep.subr.mxu0 0.0
    %1268 = vmatpush1.xpose.msra.mxu0 0.0
    %1269 = vmatprep.subr.mxu0 0.0
    %1270 = vmatpush1.xpose.msra.mxu0 0.0
    %1271 = vmatprep.subr.mxu0 0.0
    %1272 = vmatpush1.xpose.msra.mxu0 0.0
    %1273 = vmatprep.subr.mxu0 0.0
    %1274 = vmatpush1.xpose.msra.mxu0 0.0
    %1275 = vmatprep.subr.mxu0 0.0
    %1276 = vmatpush1.xpose.msra.mxu0 0.0
    %1277 = vmatprep.subr.mxu0 0.0
    %1278 = vmatpush1.xpose.msra.mxu0 0.0
    %1279 = vmatprep.subr.mxu0 0.0
    %1280 = vmatpush1.xpose.msra.mxu0 0.0
    %1281 = vmatprep.subr.mxu0 0.0
    %1282 = vmatpush1.xpose.msra.mxu0 0.0
    %1283 = vmatprep.subr.mxu0 0.0
    %1284 = vmatpush1.xpose.msra.mxu0 0.0
    %1285 = vmatprep.subr.mxu0 0.0
    %1286 = vmatpush1.xpose.msra.mxu0 0.0
    %1287 = vmatprep.subr.mxu0 0.0
    %1288 = vmatpush1.xpose.msra.mxu0 0.0
    %1289 = vmatprep.subr.mxu0 0.0
    %1290 = vmatpush1.xpose.msra.mxu0 0.0
    %1291 = vmatprep.subr.mxu0 0.0
    %1292 = vmatpush1.xpose.msra.mxu0 0.0
    %1293 = vmatprep.subr.mxu0 0.0
    %1294 = vmatpush1.xpose.msra.mxu0 0.0
    %1295 = vmatprep.mubr.f32.mxu0 0.0
    %v1296 = vand.u32 %v999, 4294901760
    %v1297 = vsub.f32 %v999, %v1296
    %v1298 = vand.u32 %v1297, 4294901760
    %1299 = vmatmul.mubr.f32.gmra.mrb[0].mxu0 %v1298
    %v1300 = vpop.f32.mrb[0].mxu0
    %v1301 = vadd.f32 %v1227, %v1300
    %v1302 = vpop.f32.mrb[0].mxu0
    %1303 = vdwg.mxu0
    %1304 = vmatprep.subr.mxu0 0.0
    %v1305 = vand.u32 %v1002, 4294901760
    %v1306 = vsub.f32 %v1002, %v1305
    %v1307 = vand.u32 %v1306, 4294901760
    %1308 = vmatpush1.xpose.msra.mxu0 %v1307
    %1309 = vmatprep.subr.mxu0 0.0
    %1310 = vmatpush1.xpose.msra.mxu0 0.0
    %1311 = vmatprep.subr.mxu0 0.0
    %1312 = vmatpush1.xpose.msra.mxu0 0.0
    %1313 = vmatprep.subr.mxu0 0.0
    %1314 = vmatpush1.xpose.msra.mxu0 0.0
    %1315 = vmatprep.subr.mxu0 0.0
    %1316 = vmatpush1.xpose.msra.mxu0 0.0
    %1317 = vmatprep.subr.mxu0 0.0
    %1318 = vmatpush1.xpose.msra.mxu0 0.0
    %1319 = vmatprep.subr.mxu0 0.0
    %1320 = vmatpush1.xpose.msra.mxu0 0.0
    %1321 = vmatprep.subr.mxu0 0.0
    %1322 = vmatpush1.xpose.msra.mxu0 0.0
    %1323 = vmatprep.subr.mxu0 0.0
    %1324 = vmatpush1.xpose.msra.mxu0 0.0
    %1325 = vmatprep.subr.mxu0 0.0
    %1326 = vmatpush1.xpose.msra.mxu0 0.0
    %1327 = vmatprep.subr.mxu0 0.0
    %1328 = vmatpush1.xpose.msra.mxu0 0.0
    %1329 = vmatprep.subr.mxu0 0.0
    %1330 = vmatpush1.xpose.msra.mxu0 0.0
    %1331 = vmatprep.subr.mxu0 0.0
    %1332 = vmatpush1.xpose.msra.mxu0 0.0
    %1333 = vmatprep.subr.mxu0 0.0
    %1334 = vmatpush1.xpose.msra.mxu0 0.0
    %1335 = vmatprep.subr.mxu0 0.0
    %1336 = vmatpush1.xpose.msra.mxu0 0.0
    %1337 = vmatprep.subr.mxu0 0.0
    %1338 = vmatpush1.xpose.msra.mxu0 0.0
    %1339 = vmatprep.subr.mxu0 0.0
    %1340 = vmatpush1.xpose.msra.mxu0 0.0
    %1341 = vmatprep.subr.mxu0 0.0
    %1342 = vmatpush1.xpose.msra.mxu0 0.0
    %1343 = vmatprep.subr.mxu0 0.0
    %1344 = vmatpush1.xpose.msra.mxu0 0.0
    %1345 = vmatprep.subr.mxu0 0.0
    %1346 = vmatpush1.xpose.msra.mxu0 0.0
    %1347 = vmatprep.subr.mxu0 0.0
    %1348 = vmatpush1.xpose.msra.mxu0 0.0
    %1349 = vmatprep.subr.mxu0 0.0
    %1350 = vmatpush1.xpose.msra.mxu0 0.0
    %1351 = vmatprep.subr.mxu0 0.0
    %1352 = vmatpush1.xpose.msra.mxu0 0.0
    %1353 = vmatprep.subr.mxu0 0.0
    %1354 = vmatpush1.xpose.msra.mxu0 0.0
    %1355 = vmatprep.subr.mxu0 0.0
    %1356 = vmatpush1.xpose.msra.mxu0 0.0
    %1357 = vmatprep.subr.mxu0 0.0
    %1358 = vmatpush1.xpose.msra.mxu0 0.0
    %1359 = vmatprep.subr.mxu0 0.0
    %1360 = vmatpush1.xpose.msra.mxu0 0.0
    %1361 = vmatprep.subr.mxu0 0.0
    %1362 = vmatpush1.xpose.msra.mxu0 0.0
    %1363 = vmatprep.subr.mxu0 0.0
    %1364 = vmatpush1.xpose.msra.mxu0 0.0
    %1365 = vmatprep.subr.mxu0 0.0
    %1366 = vmatpush1.xpose.msra.mxu0 0.0
    %1367 = vmatprep.subr.mxu0 0.0
    %1368 = vmatpush1.xpose.msra.mxu0 0.0
    %1369 = vmatprep.subr.mxu0 0.0
    %1370 = vmatpush1.xpose.msra.mxu0 0.0
    %1371 = vmatprep.mubr.f32.mxu0 0.0
    %v1372 = vand.u32 %v999, 4294901760
    %1373 = vmatmul.mubr.f32.gmra.mrb[0].mxu0 %v1372
    %v1374 = vpop.f32.mrb[0].mxu0
    %v1375 = vadd.f32 %v1301, %v1374
    %v1376 = vpop.f32.mrb[0].mxu0
    %1377 = vdwg.mxu0
    %1378 = vmatprep.subr.mxu0 0.0
    %v1379 = vand.u32 %v1002, 4294901760
    %1380 = vmatpush1.xpose.msra.mxu0 %v1379
    %1381 = vmatprep.subr.mxu0 0.0
    %1382 = vmatpush1.xpose.msra.mxu0 0.0
    %1383 = vmatprep.subr.mxu0 0.0
    %1384 = vmatpush1.xpose.msra.mxu0 0.0
    %1385 = vmatprep.subr.mxu0 0.0
    %1386 = vmatpush1.xpose.msra.mxu0 0.0
    %1387 = vmatprep.subr.mxu0 0.0
    %1388 = vmatpush1.xpose.msra.mxu0 0.0
    %1389 = vmatprep.subr.mxu0 0.0
    %1390 = vmatpush1.xpose.msra.mxu0 0.0
    %1391 = vmatprep.subr.mxu0 0.0
    %1392 = vmatpush1.xpose.msra.mxu0 0.0
    %1393 = vmatprep.subr.mxu0 0.0
    %1394 = vmatpush1.xpose.msra.mxu0 0.0
    %1395 = vmatprep.subr.mxu0 0.0
    %1396 = vmatpush1.xpose.msra.mxu0 0.0
    %1397 = vmatprep.subr.mxu0 0.0
    %1398 = vmatpush1.xpose.msra.mxu0 0.0
    %1399 = vmatprep.subr.mxu0 0.0
    %1400 = vmatpush1.xpose.msra.mxu0 0.0
    %1401 = vmatprep.subr.mxu0 0.0
    %1402 = vmatpush1.xpose.msra.mxu0 0.0
    %1403 = vmatprep.subr.mxu0 0.0
    %1404 = vmatpush1.xpose.msra.mxu0 0.0
    %1405 = vmatprep.subr.mxu0 0.0
    %1406 = vmatpush1.xpose.msra.mxu0 0.0
    %1407 = vmatprep.subr.mxu0 0.0
    %1408 = vmatpush1.xpose.msra.mxu0 0.0
    %1409 = vmatprep.subr.mxu0 0.0
    %1410 = vmatpush1.xpose.msra.mxu0 0.0
    %1411 = vmatprep.subr.mxu0 0.0
    %1412 = vmatpush1.xpose.msra.mxu0 0.0
    %1413 = vmatprep.subr.mxu0 0.0
    %1414 = vmatpush1.xpose.msra.mxu0 0.0
    %1415 = vmatprep.subr.mxu0 0.0
    %1416 = vmatpush1.xpose.msra.mxu0 0.0
    %1417 = vmatprep.subr.mxu0 0.0
    %1418 = vmatpush1.xpose.msra.mxu0 0.0
    %1419 = vmatprep.subr.mxu0 0.0
    %1420 = vmatpush1.xpose.msra.mxu0 0.0
    %1421 = vmatprep.subr.mxu0 0.0
    %1422 = vmatpush1.xpose.msra.mxu0 0.0
    %1423 = vmatprep.subr.mxu0 0.0
    %1424 = vmatpush1.xpose.msra.mxu0 0.0
    %1425 = vmatprep.subr.mxu0 0.0
    %1426 = vmatpush1.xpose.msra.mxu0 0.0
    %1427 = vmatprep.subr.mxu0 0.0
    %1428 = vmatpush1.xpose.msra.mxu0 0.0
    %1429 = vmatprep.subr.mxu0 0.0
    %1430 = vmatpush1.xpose.msra.mxu0 0.0
    %1431 = vmatprep.subr.mxu0 0.0
    %1432 = vmatpush1.xpose.msra.mxu0 0.0
    %1433 = vmatprep.subr.mxu0 0.0
    %1434 = vmatpush1.xpose.msra.mxu0 0.0
    %1435 = vmatprep.subr.mxu0 0.0
    %1436 = vmatpush1.xpose.msra.mxu0 0.0
    %1437 = vmatprep.subr.mxu0 0.0
    %1438 = vmatpush1.xpose.msra.mxu0 0.0
    %1439 = vmatprep.subr.mxu0 0.0
    %1440 = vmatpush1.xpose.msra.mxu0 0.0
    %1441 = vmatprep.subr.mxu0 0.0
    %1442 = vmatpush1.xpose.msra.mxu0 0.0
    %1443 = vmatprep.mubr.f32.mxu0 0.0
    %v1444 = vand.u32 %v999, 4294901760
    %1445 = vmatmul.mubr.f32.gmra.mrb[0].mxu0 %v1444
    %v1446 = vpop.f32.mrb[0].mxu0
    %v1447 = vadd.f32 %v1375, %v1446
    %v1448 = vpop.f32.mrb[0].mxu0
    %1449 = vdwg.mxu0
    %s1450 = sld [smem:[#allocation2]]
    %v1451 = vstv %s1450
    %v1452 = vadd.f32 %v1447, %v1451
    %v1453 = vxor.u32 %v1452, 2147483648
    %v1454 = vmul.f32 %v1453, 1.442695
    %v1455 = vpow.pop %v1454
    %v1456 = vadd.f32 %v1455, 1.0
    %v1457 = vrcp.pop %v1456
    %v1458 = vmul.f32 1.0, %v1457
    %vm1459 = vcmask 57344
    %1460 = vst.msk [vmem:[#allocation8] sm:$0x1] %vm1459, %v1458
    // Predicated region
    $region38: #{tpu_custom_call.1} parent=1 // pred_check
      _
    $region39: #{tpu_custom_call.1} parent=1 // pred_check_branch
      %1462 = sbr.rel (0) target = $region41
    $region40: #{tpu_custom_call.1} parent=1 // pred_region
      %s1464 = ssub.s32 16, 16
      %1465 = vsyncadd [#allocation5], %s1464
      %s1467 = sshll.u32 [#allocation8], 4
      %s1468 = int_to_ptr.vmem [resolvable:$true] %s1467
      %1470 = dma.vmem_to_hbm [thread:$0]  %s1468, 16, %s7, [#allocation5]
    $region41: #{tpu_custom_call.1} parent=1 // pred_fallthru
      _
    // Predicated region
    $region42: #{tpu_custom_call.1} parent=1 // pred_check
      _
    $region43: #{tpu_custom_call.1} parent=1 // pred_check_branch
      %1472 = sbr.rel (0) target = $region45
    $region44: #{tpu_custom_call.1} parent=1 // pred_region
      %1473 = dma.done [#allocation5], 16
    $region45: #{tpu_custom_call.1} parent=1 // pred_fallthru
      _
    %1474 = vsyncpa [#allocation4], 1
    %1475 = vsyncpa [#allocation7], 1
    %1476 = vsyncpa [#allocation5], 1

</llo_original>
